<compile_context>
chip_gen: v7x
topology: tpu7x:2x2x1
jax: 0.10.0
libtpu: 0.0.40
codegen_flags: <defaults>
</compile_context>

<pallas_src>
import functools
import math

import jax
import jax.numpy as jnp
import numpy as np
from jax import lax
from jax.experimental import pallas as pl
from jax.experimental.pallas import tpu as pltpu

LN_EPS = 1e-5  # PyTorch nn.LayerNorm default


def _layer_norm(x, gamma, beta):
    mean = jnp.mean(x, axis=-1, keepdims=True)
    var = jnp.mean(jnp.square(x - mean), axis=-1, keepdims=True)
    return (x - mean) * lax.rsqrt(var + LN_EPS) * gamma + beta


def encoder_layer_kernel(
    n_heads,
    x_ref,
    wq_ref, wk_ref, wv_ref, wo_ref,
    bq_ref, bk_ref, bv_ref, bo_ref,
    w1_ref, b1_ref, w2_ref, b2_ref,
    g1_ref, be1_ref, g2_ref, be2_ref,
    o_ref,
):
    Bt, S, D = x_ref.shape
    H = n_heads
    hd = D // H
    M = Bt * S
    scale = 1.0 / math.sqrt(hd)

    x = x_ref[...].reshape(M, D)                 # f32 residual copy
    xb = x.astype(jnp.bfloat16)

    # ---- fused full-D Q/K/V projections (bf16 on the MXU, f32 accumulate) ----
    # bias-add fused with the bf16 cast so the f32 (M,D) temporaries die here.
    q3 = (jnp.dot(xb, wq_ref[...], preferred_element_type=jnp.float32)
          + bq_ref[...]).astype(jnp.bfloat16).reshape(Bt, S, D)
    k3 = (jnp.dot(xb, wk_ref[...], preferred_element_type=jnp.float32)
          + bk_ref[...]).astype(jnp.bfloat16).reshape(Bt, S, D)
    v3 = (jnp.dot(xb, wv_ref[...], preferred_element_type=jnp.float32)
          + bv_ref[...]).astype(jnp.bfloat16).reshape(Bt, S, D)

    # ---- all heads batched into ONE dot_general pair (batch dim = H*Bt) ----
    # Head h lives in lane slice [h*hd, (h+1)*hd); stack heads along a new
    # leading (major) axis so the attention matmuls are a single batched
    # MXU stream and the softmax is emitted once.
    qh = jnp.concatenate([q3[:, :, h * hd:(h + 1) * hd] for h in range(H)], axis=0)
    kh = jnp.concatenate([k3[:, :, h * hd:(h + 1) * hd] for h in range(H)], axis=0)
    vh = jnp.concatenate([v3[:, :, h * hd:(h + 1) * hd] for h in range(H)], axis=0)
    # qh/kh/vh: (H*Bt, S, hd) bf16

    s = lax.dot_general(qh, kh, (((2,), (2,)), ((0,), (0,))),
                        preferred_element_type=jnp.float32) * scale   # (H*Bt, S, S)
    s = s - jnp.max(s, axis=-1, keepdims=True)
    e = jnp.exp(s)
    p = e * pl.reciprocal(jnp.sum(e, axis=-1, keepdims=True), approx=True)

    ctx = lax.dot_general(p.astype(jnp.bfloat16), vh,
                          (((2,), (1,)), ((0,), (0,))),
                          preferred_element_type=jnp.float32)          # (H*Bt, S, hd)
    ctxb = ctx.astype(jnp.bfloat16)

    # ---- lane-dense head merge (value-level concat, no masked stores) ----
    ctx_md = jnp.concatenate(
        [ctxb[h * Bt:(h + 1) * Bt] for h in range(H)], axis=-1
    ).reshape(M, D)                                                    # (M, D) bf16

    # single full-D output projection of concatenated heads
    attn = jnp.dot(ctx_md, wo_ref[...],
                   preferred_element_type=jnp.float32) + bo_ref[...]

    # residual 1 + dropout1 (identity at eval) + LayerNorm 1
    y = _layer_norm(x + attn, g1_ref[...], be1_ref[...])
    yb = y.astype(jnp.bfloat16)

    # ---- feed-forward: ReLU(y W1 + b1) W2 + b2 (intermediate cast to bf16) ----
    h1 = jnp.maximum(
        jnp.dot(yb, w1_ref[...], preferred_element_type=jnp.float32) + b1_ref[...],
        0.0,
    ).astype(jnp.bfloat16)
    ff = jnp.dot(h1, w2_ref[...],
                 preferred_element_type=jnp.float32) + b2_ref[...]

    # residual 2 + dropout2 (identity at eval) + LayerNorm 2
    out = _layer_norm(y + ff, g2_ref[...], be2_ref[...])
    o_ref[...] = out.reshape(Bt, S, D).astype(o_ref.dtype)


PARAM_ORDER = ("wq", "wk", "wv", "wo", "bq", "bk", "bv", "bo",
               "w1", "b1", "w2", "b2", "g1", "be1", "g2", "be2")


def _vmem_budget_bytes():
    """VMEM budget with headroom below physical capacity (chip-aware)."""
    try:
        cap = int(pltpu.get_tpu_info().vmem_capacity_bytes)
    except Exception:
        cap = 64 * 1024 * 1024            # conservative default (v7x per-TC VMEM)
    return min(cap - cap // 4, 100 * 1024 * 1024)   # 128MiB->96MiB, 64MiB->48MiB


def _estimate_step_vmem(bt, S, D, H, d_ff):
    """Rough per-grid-step activation/IO footprint (bytes) for a (bt, S, D) block."""
    M = bt * S
    io = 2 * 2 * M * D * 4                      # double-buffered f32 x-in + out blocks
    act = 3 * M * D * (4 + 2)                   # q/k/v f32 accum + bf16 copies
    act += H * bt * S * S * (4 + 2)             # scores f32 + probs bf16
    act += M * D * (4 + 2)                      # ctx f32 + bf16 merge
    act += M * d_ff * (4 + 2)                   # FFN intermediate f32 + bf16
    act += 3 * M * D * 4                        # attn/y/ff f32 residual-path values
    return io + act


def _pick_batch_block(B, S, D, H, d_ff, weights_bytes, vmem_budget):
    """Largest batch block whose working set fits; prefer an even grid-step count
    (both v7x TensorCores busy) only when each step still has >= 256 rows."""
    divisors = [d for d in range(1, B + 1) if B % d == 0]
    budget = max(vmem_budget - weights_bytes, vmem_budget // 4)
    fits = [d for d in divisors if _estimate_step_vmem(d, S, D, H, d_ff) <= budget]
    if not fits:
        fits = [divisors[0]]
    even = [d for d in fits if (B // d) >= 2 and (B // d) % 2 == 0 and d * S >= 256]
    return max(even) if even else max(fits)


def transformer_encoder_layer(x, params, n_heads, batch_block=None):
    B, S, D = x.shape
    d_ff = params["w1"].shape[-1]
    param_list = [params[name] for name in PARAM_ORDER]
    weights_bytes = sum(int(np.prod(a.shape)) * a.dtype.itemsize for a in param_list)

    budget = _vmem_budget_bytes()
    bt = batch_block if batch_block is not None else _pick_batch_block(
        B, S, D, n_heads, d_ff, weights_bytes, budget)
    assert B % bt == 0, "batch must be divisible by the batch block"

    def const_spec(a):
        # Weights/biases never change across the grid -> single-buffer them.
        return pl.BlockSpec(a.shape, lambda b: (0,) * a.ndim,
                            pipeline_mode=pl.Buffered(1))

    in_specs = [pl.BlockSpec((bt, S, D), lambda b: (b, 0, 0))]
    in_specs += [const_spec(a) for a in param_list]
    out_spec = pl.BlockSpec((bt, S, D), lambda b: (b, 0, 0))

    kernel = functools.partial(encoder_layer_kernel, n_heads)
    return pl.pallas_call(
        kernel,
        out_shape=jax.ShapeDtypeStruct((B, S, D), x.dtype),
        grid_spec=pltpu.PrefetchScalarGridSpec(
            num_scalar_prefetch=0,
            grid=(B // bt,),
            in_specs=in_specs,
            out_specs=out_spec,
        ),
        compiler_params=pltpu.CompilerParams(
            dimension_semantics=("parallel",),
            vmem_limit_bytes=budget,
        ),
    )(x, *param_list)


# ---------------- pure-JAX f32 reference (full, unsplit weights) ----------------
def reference(x, P, n_heads):
    B, S, D = x.shape
    hd = D // n_heads
    q = x @ P["Wq"] + P["bq"]
    k = x @ P["Wk"] + P["bk"]
    v = x @ P["Wv"] + P["bv"]
    q = q.reshape(B, S, n_heads, hd)
    k = k.reshape(B, S, n_heads, hd)
    v = v.reshape(B, S, n_heads, hd)
    s = jnp.einsum("bqhd,bkhd->bhqk", q, k) / math.sqrt(hd)
    p = jax.nn.softmax(s, axis=-1)
    ctx = jnp.einsum("bhqk,bkhd->bqhd", p, v).reshape(B, S, D)
    attn_out = ctx @ P["Wo"] + P["bo"]
    y = _layer_norm(x + attn_out, P["g1"], P["be1"])
    ff = jnp.maximum(y @ P["W1"] + P["b1"], 0.0) @ P["W2"] + P["b2"]
    return _layer_norm(y + ff, P["g2"], P["be2"])


if __name__ == "__main__":
    B, S, D, H, d_ff = 2, 8, 32, 4, 64
    key = jax.random.PRNGKey(0)
    ks = jax.random.split(key, 20)

    def nrm(k, shape, scale=0.05):
        return (scale * jax.random.normal(k, shape)).astype(jnp.float32)

    full = {
        "Wq": nrm(ks[0], (D, D)), "bq": nrm(ks[1], (D,)),
        "Wk": nrm(ks[2], (D, D)), "bk": nrm(ks[3], (D,)),
        "Wv": nrm(ks[4], (D, D)), "bv": nrm(ks[5], (D,)),
        "Wo": nrm(ks[6], (D, D)), "bo": nrm(ks[7], (D,)),
        "W1": nrm(ks[8], (D, d_ff)), "b1": nrm(ks[9], (d_ff,)),
        "W2": nrm(ks[10], (d_ff, D)), "b2": nrm(ks[11], (D,)),
        "g1": (1.0 + 0.1 * jax.random.normal(ks[12], (D,))).astype(jnp.float32),
        "be1": nrm(ks[13], (D,), 0.1),
        "g2": (1.0 + 0.1 * jax.random.normal(ks[14], (D,))).astype(jnp.float32),
        "be2": nrm(ks[15], (D,), 0.1),
    }

    # lane-dense kernel params: bf16 (D,D)/(D,d_ff) weights, f32 (1, D)/(1, d_ff) vectors
    params = {
        "wq": full["Wq"].astype(jnp.bfloat16),
        "wk": full["Wk"].astype(jnp.bfloat16),
        "wv": full["Wv"].astype(jnp.bfloat16),
        "wo": full["Wo"].astype(jnp.bfloat16),
        "bq": full["bq"].reshape(1, D),
        "bk": full["bk"].reshape(1, D),
        "bv": full["bv"].reshape(1, D),
        "bo": full["bo"].reshape(1, D),
        "w1": full["W1"].astype(jnp.bfloat16),
        "b1": full["b1"].reshape(1, d_ff),
        "w2": full["W2"].astype(jnp.bfloat16),
        "b2": full["b2"].reshape(1, D),
        "g1": full["g1"].reshape(1, D), "be1": full["be1"].reshape(1, D),
        "g2": full["g2"].reshape(1, D), "be2": full["be2"].reshape(1, D),
    }

    x = jax.random.normal(ks[16], (B, S, D), dtype=jnp.float32)

    out = transformer_encoder_layer(x, params, H)
    out = jax.block_until_ready(out)

    ref = jax.block_until_ready(reference(x, full, H))
    # bf16 matmuls + approx reciprocal vs. f32 reference -> loose tolerance
    np.testing.assert_allclose(np.asarray(out), np.asarray(ref),
                               rtol=3e-2, atol=3e-2)
    print("KERNEL_OK")
</pallas_src>

<mosaic_0001>
module attributes {stable_mosaic.version = 11 : i64} {
  func.func @encoder_layer_kernel(%arg0: i32, %arg1: memref<2x8x32xf32, #tpu.memory_space<vmem>>, %arg2: memref<32x32xbf16, #tpu.memory_space<vmem>>, %arg3: memref<32x32xbf16, #tpu.memory_space<vmem>>, %arg4: memref<32x32xbf16, #tpu.memory_space<vmem>>, %arg5: memref<32x32xbf16, #tpu.memory_space<vmem>>, %arg6: memref<1x32xf32, #tpu.memory_space<vmem>>, %arg7: memref<1x32xf32, #tpu.memory_space<vmem>>, %arg8: memref<1x32xf32, #tpu.memory_space<vmem>>, %arg9: memref<1x32xf32, #tpu.memory_space<vmem>>, %arg10: memref<32x64xbf16, #tpu.memory_space<vmem>>, %arg11: memref<1x64xf32, #tpu.memory_space<vmem>>, %arg12: memref<64x32xbf16, #tpu.memory_space<vmem>>, %arg13: memref<1x32xf32, #tpu.memory_space<vmem>>, %arg14: memref<1x32xf32, #tpu.memory_space<vmem>>, %arg15: memref<1x32xf32, #tpu.memory_space<vmem>>, %arg16: memref<1x32xf32, #tpu.memory_space<vmem>>, %arg17: memref<1x32xf32, #tpu.memory_space<vmem>>, %arg18: memref<2x8x32xf32, #tpu.memory_space<vmem>>) attributes {dimension_semantics = [#tpu.dimension_semantics<parallel>], iteration_bounds = array<i64: 1>, scalar_prefetch = 0 : i64, scratch_operands = 0 : i64, tpu.core_type = #tpu.core_type<tc>, window_params = [{transform_indices = @transform_0, window_bounds = array<i64: 2, 8, 32>}, {pipeline_mode = #tpu.pipeline_mode<synchronous>, transform_indices = @transform_1, window_bounds = array<i64: 32, 32>}, {pipeline_mode = #tpu.pipeline_mode<synchronous>, transform_indices = @transform_2, window_bounds = array<i64: 32, 32>}, {pipeline_mode = #tpu.pipeline_mode<synchronous>, transform_indices = @transform_3, window_bounds = array<i64: 32, 32>}, {pipeline_mode = #tpu.pipeline_mode<synchronous>, transform_indices = @transform_4, window_bounds = array<i64: 32, 32>}, {pipeline_mode = #tpu.pipeline_mode<synchronous>, transform_indices = @transform_5, window_bounds = array<i64: 1, 32>}, {pipeline_mode = #tpu.pipeline_mode<synchronous>, transform_indices = @transform_6, window_bounds = array<i64: 1, 32>}, {pipeline_mode = #tpu.pipeline_mode<synchronous>, transform_indices = @transform_7, window_bounds = array<i64: 1, 32>}, {pipeline_mode = #tpu.pipeline_mode<synchronous>, transform_indices = @transform_8, window_bounds = array<i64: 1, 32>}, {pipeline_mode = #tpu.pipeline_mode<synchronous>, transform_indices = @transform_9, window_bounds = array<i64: 32, 64>}, {pipeline_mode = #tpu.pipeline_mode<synchronous>, transform_indices = @transform_10, window_bounds = array<i64: 1, 64>}, {pipeline_mode = #tpu.pipeline_mode<synchronous>, transform_indices = @transform_11, window_bounds = array<i64: 64, 32>}, {pipeline_mode = #tpu.pipeline_mode<synchronous>, transform_indices = @transform_12, window_bounds = array<i64: 1, 32>}, {pipeline_mode = #tpu.pipeline_mode<synchronous>, transform_indices = @transform_13, window_bounds = array<i64: 1, 32>}, {pipeline_mode = #tpu.pipeline_mode<synchronous>, transform_indices = @transform_14, window_bounds = array<i64: 1, 32>}, {pipeline_mode = #tpu.pipeline_mode<synchronous>, transform_indices = @transform_15, window_bounds = array<i64: 1, 32>}, {pipeline_mode = #tpu.pipeline_mode<synchronous>, transform_indices = @transform_16, window_bounds = array<i64: 1, 32>}, {transform_indices = @transform_17, window_bounds = array<i64: 2, 8, 32>}]} {
    %c0 = arith.constant 0 : index
    %c0_0 = arith.constant 0 : index
    %c0_1 = arith.constant 0 : index
    %0 = vector.load %arg1[%c0, %c0_0, %c0_1] : memref<2x8x32xf32, #tpu.memory_space<vmem>>, vector<2x8x32xf32>
    %1 = vector.shape_cast %0 : vector<2x8x32xf32> to vector<16x32xf32>
    %2 = arith.truncf %1 : vector<16x32xf32> to vector<16x32xbf16>
    %c0_2 = arith.constant 0 : index
    %c0_3 = arith.constant 0 : index
    %3 = vector.load %arg2[%c0_2, %c0_3] : memref<32x32xbf16, #tpu.memory_space<vmem>>, vector<32x32xbf16>
    %cst = arith.constant dense<0.000000e+00> : vector<16x32xf32>
    %4 = tpu.matmul %2, %3, %cst {dimension_numbers = #tpu.dot_dimension_numbers<[1], [0], [0], [1], [0, 0, 1, 1], [], []>} : vector<16x32xbf16>, vector<32x32xbf16>, vector<16x32xf32> -> vector<16x32xf32>
    %c0_4 = arith.constant 0 : index
    %c0_5 = arith.constant 0 : index
    %5 = vector.load %arg6[%c0_4, %c0_5] : memref<1x32xf32, #tpu.memory_space<vmem>>, vector<1x32xf32>
    %6 = vector.broadcast %5 : vector<1x32xf32> to vector<16x32xf32>
    %7 = arith.addf %4, %6 : vector<16x32xf32>
    %8 = arith.truncf %7 : vector<16x32xf32> to vector<16x32xbf16>
    %9 = vector.shape_cast %8 : vector<16x32xbf16> to vector<2x8x32xbf16>
    %c0_6 = arith.constant 0 : index
    %c0_7 = arith.constant 0 : index
    %10 = vector.load %arg3[%c0_6, %c0_7] : memref<32x32xbf16, #tpu.memory_space<vmem>>, vector<32x32xbf16>
    %cst_8 = arith.constant dense<0.000000e+00> : vector<16x32xf32>
    %11 = tpu.matmul %2, %10, %cst_8 {dimension_numbers = #tpu.dot_dimension_numbers<[1], [0], [0], [1], [0, 0, 1, 1], [], []>} : vector<16x32xbf16>, vector<32x32xbf16>, vector<16x32xf32> -> vector<16x32xf32>
    %c0_9 = arith.constant 0 : index
    %c0_10 = arith.constant 0 : index
    %12 = vector.load %arg7[%c0_9, %c0_10] : memref<1x32xf32, #tpu.memory_space<vmem>>, vector<1x32xf32>
    %13 = vector.broadcast %12 : vector<1x32xf32> to vector<16x32xf32>
    %14 = arith.addf %11, %13 : vector<16x32xf32>
    %15 = arith.truncf %14 : vector<16x32xf32> to vector<16x32xbf16>
    %16 = vector.shape_cast %15 : vector<16x32xbf16> to vector<2x8x32xbf16>
    %c0_11 = arith.constant 0 : index
    %c0_12 = arith.constant 0 : index
    %17 = vector.load %arg4[%c0_11, %c0_12] : memref<32x32xbf16, #tpu.memory_space<vmem>>, vector<32x32xbf16>
    %cst_13 = arith.constant dense<0.000000e+00> : vector<16x32xf32>
    %18 = tpu.matmul %2, %17, %cst_13 {dimension_numbers = #tpu.dot_dimension_numbers<[1], [0], [0], [1], [0, 0, 1, 1], [], []>} : vector<16x32xbf16>, vector<32x32xbf16>, vector<16x32xf32> -> vector<16x32xf32>
    %c0_14 = arith.constant 0 : index
    %c0_15 = arith.constant 0 : index
    %19 = vector.load %arg8[%c0_14, %c0_15] : memref<1x32xf32, #tpu.memory_space<vmem>>, vector<1x32xf32>
    %20 = vector.broadcast %19 : vector<1x32xf32> to vector<16x32xf32>
    %21 = arith.addf %18, %20 : vector<16x32xf32>
    %22 = arith.truncf %21 : vector<16x32xf32> to vector<16x32xbf16>
    %23 = vector.shape_cast %22 : vector<16x32xbf16> to vector<2x8x32xbf16>
    %24 = vector.extract_strided_slice %9 {offsets = [0, 0, 0], sizes = [2, 8, 8], strides = [1, 1, 1]} : vector<2x8x32xbf16> to vector<2x8x8xbf16>
    %25 = vector.extract_strided_slice %9 {offsets = [0, 0, 8], sizes = [2, 8, 8], strides = [1, 1, 1]} : vector<2x8x32xbf16> to vector<2x8x8xbf16>
    %26 = vector.extract_strided_slice %9 {offsets = [0, 0, 16], sizes = [2, 8, 8], strides = [1, 1, 1]} : vector<2x8x32xbf16> to vector<2x8x8xbf16>
    %27 = vector.extract_strided_slice %9 {offsets = [0, 0, 24], sizes = [2, 8, 8], strides = [1, 1, 1]} : vector<2x8x32xbf16> to vector<2x8x8xbf16>
    %28 = tpu.concatenate %24, %25, %26, %27 in 0 : vector<2x8x8xbf16>, vector<2x8x8xbf16>, vector<2x8x8xbf16>, vector<2x8x8xbf16> -> vector<8x8x8xbf16>
    %29 = vector.extract_strided_slice %16 {offsets = [0, 0, 0], sizes = [2, 8, 8], strides = [1, 1, 1]} : vector<2x8x32xbf16> to vector<2x8x8xbf16>
    %30 = vector.extract_strided_slice %16 {offsets = [0, 0, 8], sizes = [2, 8, 8], strides = [1, 1, 1]} : vector<2x8x32xbf16> to vector<2x8x8xbf16>
    %31 = vector.extract_strided_slice %16 {offsets = [0, 0, 16], sizes = [2, 8, 8], strides = [1, 1, 1]} : vector<2x8x32xbf16> to vector<2x8x8xbf16>
    %32 = vector.extract_strided_slice %16 {offsets = [0, 0, 24], sizes = [2, 8, 8], strides = [1, 1, 1]} : vector<2x8x32xbf16> to vector<2x8x8xbf16>
    %33 = tpu.concatenate %29, %30, %31, %32 in 0 : vector<2x8x8xbf16>, vector<2x8x8xbf16>, vector<2x8x8xbf16>, vector<2x8x8xbf16> -> vector<8x8x8xbf16>
    %34 = vector.extract_strided_slice %23 {offsets = [0, 0, 0], sizes = [2, 8, 8], strides = [1, 1, 1]} : vector<2x8x32xbf16> to vector<2x8x8xbf16>
    %35 = vector.extract_strided_slice %23 {offsets = [0, 0, 8], sizes = [2, 8, 8], strides = [1, 1, 1]} : vector<2x8x32xbf16> to vector<2x8x8xbf16>
    %36 = vector.extract_strided_slice %23 {offsets = [0, 0, 16], sizes = [2, 8, 8], strides = [1, 1, 1]} : vector<2x8x32xbf16> to vector<2x8x8xbf16>
    %37 = vector.extract_strided_slice %23 {offsets = [0, 0, 24], sizes = [2, 8, 8], strides = [1, 1, 1]} : vector<2x8x32xbf16> to vector<2x8x8xbf16>
    %38 = tpu.concatenate %34, %35, %36, %37 in 0 : vector<2x8x8xbf16>, vector<2x8x8xbf16>, vector<2x8x8xbf16>, vector<2x8x8xbf16> -> vector<8x8x8xbf16>
    %cst_16 = arith.constant dense<0.000000e+00> : vector<8x8x8xf32>
    %39 = tpu.matmul %28, %33, %cst_16 {dimension_numbers = #tpu.dot_dimension_numbers<[2], [2], [1], [1], [0, 0, 0, 1, 1, 1], [0], [0]>} : vector<8x8x8xbf16>, vector<8x8x8xbf16>, vector<8x8x8xf32> -> vector<8x8x8xf32>
    %cst_17 = arith.constant 0.353553385 : f32
    %40 = vector.broadcast %cst_17 : f32 to vector<8x8x8xf32>
    %41 = arith.mulf %39, %40 : vector<8x8x8xf32>
    %cst_18 = arith.constant dense<0xFF800000> : vector<8x8xf32>
    %42 = vector.multi_reduction <maximumf>, %41, %cst_18 [2] : vector<8x8x8xf32> to vector<8x8xf32>
    %43 = vector.shape_cast %42 : vector<8x8xf32> to vector<8x8x1xf32>
    %44 = vector.broadcast %43 : vector<8x8x1xf32> to vector<8x8x8xf32>
    %45 = arith.subf %41, %44 : vector<8x8x8xf32>
    %46 = math.exp %45 : vector<8x8x8xf32>
    %cst_19 = arith.constant dense<0.000000e+00> : vector<8x8xf32>
    %47 = vector.multi_reduction <add>, %46, %cst_19 [2] : vector<8x8x8xf32> to vector<8x8xf32>
    %48 = vector.shape_cast %47 : vector<8x8xf32> to vector<8x8x1xf32>
    %49 = tpu.reciprocal %48 {approx = true} : vector<8x8x1xf32> -> vector<8x8x1xf32>
    %50 = vector.broadcast %49 : vector<8x8x1xf32> to vector<8x8x8xf32>
    %51 = arith.mulf %46, %50 : vector<8x8x8xf32>
    %52 = arith.truncf %51 : vector<8x8x8xf32> to vector<8x8x8xbf16>
    %cst_20 = arith.constant dense<0.000000e+00> : vector<8x8x8xf32>
    %53 = tpu.matmul %52, %38, %cst_20 {dimension_numbers = #tpu.dot_dimension_numbers<[2], [1], [1], [2], [0, 0, 0, 1, 1, 2], [0], [0]>} : vector<8x8x8xbf16>, vector<8x8x8xbf16>, vector<8x8x8xf32> -> vector<8x8x8xf32>
    %54 = arith.truncf %53 : vector<8x8x8xf32> to vector<8x8x8xbf16>
    %55 = vector.extract_strided_slice %54 {offsets = [0, 0, 0], sizes = [2, 8, 8], strides = [1, 1, 1]} : vector<8x8x8xbf16> to vector<2x8x8xbf16>
    %56 = vector.extract_strided_slice %54 {offsets = [2, 0, 0], sizes = [2, 8, 8], strides = [1, 1, 1]} : vector<8x8x8xbf16> to vector<2x8x8xbf16>
    %57 = vector.extract_strided_slice %54 {offsets = [4, 0, 0], sizes = [2, 8, 8], strides = [1, 1, 1]} : vector<8x8x8xbf16> to vector<2x8x8xbf16>
    %58 = vector.extract_strided_slice %54 {offsets = [6, 0, 0], sizes = [2, 8, 8], strides = [1, 1, 1]} : vector<8x8x8xbf16> to vector<2x8x8xbf16>
    %59 = tpu.concatenate %55, %56, %57, %58 in 2 : vector<2x8x8xbf16>, vector<2x8x8xbf16>, vector<2x8x8xbf16>, vector<2x8x8xbf16> -> vector<2x8x32xbf16>
    %60 = vector.shape_cast %59 : vector<2x8x32xbf16> to vector<16x32xbf16>
    %c0_21 = arith.constant 0 : index
    %c0_22 = arith.constant 0 : index
    %61 = vector.load %arg5[%c0_21, %c0_22] : memref<32x32xbf16, #tpu.memory_space<vmem>>, vector<32x32xbf16>
    %cst_23 = arith.constant dense<0.000000e+00> : vector<16x32xf32>
    %62 = tpu.matmul %60, %61, %cst_23 {dimension_numbers = #tpu.dot_dimension_numbers<[1], [0], [0], [1], [0, 0, 1, 1], [], []>} : vector<16x32xbf16>, vector<32x32xbf16>, vector<16x32xf32> -> vector<16x32xf32>
    %c0_24 = arith.constant 0 : index
    %c0_25 = arith.constant 0 : index
    %63 = vector.load %arg9[%c0_24, %c0_25] : memref<1x32xf32, #tpu.memory_space<vmem>>, vector<1x32xf32>
    %64 = vector.broadcast %63 : vector<1x32xf32> to vector<16x32xf32>
    %65 = arith.addf %62, %64 : vector<16x32xf32>
    %66 = arith.addf %1, %65 : vector<16x32xf32>
    %c0_26 = arith.constant 0 : index
    %c0_27 = arith.constant 0 : index
    %67 = vector.load %arg14[%c0_26, %c0_27] : memref<1x32xf32, #tpu.memory_space<vmem>>, vector<1x32xf32>
    %c0_28 = arith.constant 0 : index
    %c0_29 = arith.constant 0 : index
    %68 = vector.load %arg15[%c0_28, %c0_29] : memref<1x32xf32, #tpu.memory_space<vmem>>, vector<1x32xf32>
    %cst_30 = arith.constant dense<0.000000e+00> : vector<16xf32>
    %69 = vector.multi_reduction <add>, %66, %cst_30 [1] : vector<16x32xf32> to vector<16xf32>
    %70 = vector.shape_cast %69 : vector<16xf32> to vector<16x1xf32>
    %cst_31 = arith.constant 3.200000e+01 : f32
    %71 = vector.broadcast %cst_31 : f32 to vector<16x1xf32>
    %72 = arith.divf %70, %71 : vector<16x1xf32>
    %73 = vector.broadcast %72 : vector<16x1xf32> to vector<16x32xf32>
    %74 = arith.subf %66, %73 : vector<16x32xf32>
    %75 = arith.mulf %74, %74 : vector<16x32xf32>
    %cst_32 = arith.constant dense<0.000000e+00> : vector<16xf32>
    %76 = vector.multi_reduction <add>, %75, %cst_32 [1] : vector<16x32xf32> to vector<16xf32>
    %77 = vector.shape_cast %76 : vector<16xf32> to vector<16x1xf32>
    %cst_33 = arith.constant 3.200000e+01 : f32
    %78 = vector.broadcast %cst_33 : f32 to vector<16x1xf32>
    %79 = arith.divf %77, %78 : vector<16x1xf32>
    %80 = vector.broadcast %72 : vector<16x1xf32> to vector<16x32xf32>
    %81 = arith.subf %66, %80 : vector<16x32xf32>
    %cst_34 = arith.constant 9.99999974E-6 : f32
    %82 = vector.broadcast %cst_34 : f32 to vector<16x1xf32>
    %83 = arith.addf %79, %82 : vector<16x1xf32>
    %84 = math.rsqrt %83 : vector<16x1xf32>
    %85 = vector.broadcast %84 : vector<16x1xf32> to vector<16x32xf32>
    %86 = arith.mulf %81, %85 : vector<16x32xf32>
    %87 = vector.broadcast %67 : vector<1x32xf32> to vector<16x32xf32>
    %88 = arith.mulf %86, %87 : vector<16x32xf32>
    %89 = vector.broadcast %68 : vector<1x32xf32> to vector<16x32xf32>
    %90 = arith.addf %88, %89 : vector<16x32xf32>
    %91 = arith.truncf %90 : vector<16x32xf32> to vector<16x32xbf16>
    %c0_35 = arith.constant 0 : index
    %c0_36 = arith.constant 0 : index
    %92 = vector.load %arg10[%c0_35, %c0_36] : memref<32x64xbf16, #tpu.memory_space<vmem>>, vector<32x64xbf16>
    %cst_37 = arith.constant dense<0.000000e+00> : vector<16x64xf32>
    %93 = tpu.matmul %91, %92, %cst_37 {dimension_numbers = #tpu.dot_dimension_numbers<[1], [0], [0], [1], [0, 0, 1, 1], [], []>} : vector<16x32xbf16>, vector<32x64xbf16>, vector<16x64xf32> -> vector<16x64xf32>
    %c0_38 = arith.constant 0 : index
    %c0_39 = arith.constant 0 : index
    %94 = vector.load %arg11[%c0_38, %c0_39] : memref<1x64xf32, #tpu.memory_space<vmem>>, vector<1x64xf32>
    %95 = vector.broadcast %94 : vector<1x64xf32> to vector<16x64xf32>
    %96 = arith.addf %93, %95 : vector<16x64xf32>
    %cst_40 = arith.constant 0.000000e+00 : f32
    %97 = vector.broadcast %cst_40 : f32 to vector<16x64xf32>
    %98 = arith.maximumf %96, %97 : vector<16x64xf32>
    %99 = arith.truncf %98 : vector<16x64xf32> to vector<16x64xbf16>
    %c0_41 = arith.constant 0 : index
    %c0_42 = arith.constant 0 : index
    %100 = vector.load %arg12[%c0_41, %c0_42] : memref<64x32xbf16, #tpu.memory_space<vmem>>, vector<64x32xbf16>
    %cst_43 = arith.constant dense<0.000000e+00> : vector<16x32xf32>
    %101 = tpu.matmul %99, %100, %cst_43 {dimension_numbers = #tpu.dot_dimension_numbers<[1], [0], [0], [1], [0, 0, 1, 1], [], []>} : vector<16x64xbf16>, vector<64x32xbf16>, vector<16x32xf32> -> vector<16x32xf32>
    %c0_44 = arith.constant 0 : index
    %c0_45 = arith.constant 0 : index
    %102 = vector.load %arg13[%c0_44, %c0_45] : memref<1x32xf32, #tpu.memory_space<vmem>>, vector<1x32xf32>
    %103 = vector.broadcast %102 : vector<1x32xf32> to vector<16x32xf32>
    %104 = arith.addf %101, %103 : vector<16x32xf32>
    %105 = arith.addf %90, %104 : vector<16x32xf32>
    %c0_46 = arith.constant 0 : index
    %c0_47 = arith.constant 0 : index
    %106 = vector.load %arg16[%c0_46, %c0_47] : memref<1x32xf32, #tpu.memory_space<vmem>>, vector<1x32xf32>
    %c0_48 = arith.constant 0 : index
    %c0_49 = arith.constant 0 : index
    %107 = vector.load %arg17[%c0_48, %c0_49] : memref<1x32xf32, #tpu.memory_space<vmem>>, vector<1x32xf32>
    %cst_50 = arith.constant dense<0.000000e+00> : vector<16xf32>
    %108 = vector.multi_reduction <add>, %105, %cst_50 [1] : vector<16x32xf32> to vector<16xf32>
    %109 = vector.shape_cast %108 : vector<16xf32> to vector<16x1xf32>
    %cst_51 = arith.constant 3.200000e+01 : f32
    %110 = vector.broadcast %cst_51 : f32 to vector<16x1xf32>
    %111 = arith.divf %109, %110 : vector<16x1xf32>
    %112 = vector.broadcast %111 : vector<16x1xf32> to vector<16x32xf32>
    %113 = arith.subf %105, %112 : vector<16x32xf32>
    %114 = arith.mulf %113, %113 : vector<16x32xf32>
    %cst_52 = arith.constant dense<0.000000e+00> : vector<16xf32>
    %115 = vector.multi_reduction <add>, %114, %cst_52 [1] : vector<16x32xf32> to vector<16xf32>
    %116 = vector.shape_cast %115 : vector<16xf32> to vector<16x1xf32>
    %cst_53 = arith.constant 3.200000e+01 : f32
    %117 = vector.broadcast %cst_53 : f32 to vector<16x1xf32>
    %118 = arith.divf %116, %117 : vector<16x1xf32>
    %119 = vector.broadcast %111 : vector<16x1xf32> to vector<16x32xf32>
    %120 = arith.subf %105, %119 : vector<16x32xf32>
    %cst_54 = arith.constant 9.99999974E-6 : f32
    %121 = vector.broadcast %cst_54 : f32 to vector<16x1xf32>
    %122 = arith.addf %118, %121 : vector<16x1xf32>
    %123 = math.rsqrt %122 : vector<16x1xf32>
    %124 = vector.broadcast %123 : vector<16x1xf32> to vector<16x32xf32>
    %125 = arith.mulf %120, %124 : vector<16x32xf32>
    %126 = vector.broadcast %106 : vector<1x32xf32> to vector<16x32xf32>
    %127 = arith.mulf %125, %126 : vector<16x32xf32>
    %128 = vector.broadcast %107 : vector<1x32xf32> to vector<16x32xf32>
    %129 = arith.addf %127, %128 : vector<16x32xf32>
    %130 = vector.shape_cast %129 : vector<16x32xf32> to vector<2x8x32xf32>
    %c0_55 = arith.constant 0 : index
    %c0_56 = arith.constant 0 : index
    %c0_57 = arith.constant 0 : index
    %131 = vector.load %arg18[%c0_55, %c0_56, %c0_57] : memref<2x8x32xf32, #tpu.memory_space<vmem>>, vector<2x8x32xf32>
    tpu.vector_store %arg18[%c0_55, %c0_56, %c0_57], %130 {strides = array<i32>} : memref<2x8x32xf32, #tpu.memory_space<vmem>>, vector<2x8x32xf32>,
    return
  }
  func.func @transform_0(%arg0: i32) -> (i32, i32, i32) {
    %c0_i32 = arith.constant 0 : i32
    %c0_i32_0 = arith.constant 0 : i32
    %c0_i32_1 = arith.constant 0 : i32
    return %arg0, %c0_i32, %c0_i32_0 : i32, i32, i32
  }
  func.func @transform_1(%arg0: i32) -> (i32, i32) {
    %c0_i32 = arith.constant 0 : i32
    %c0_i32_0 = arith.constant 0 : i32
    %c0_i32_1 = arith.constant 0 : i32
    return %c0_i32, %c0_i32_0 : i32, i32
  }
  func.func @transform_2(%arg0: i32) -> (i32, i32) {
    %c0_i32 = arith.constant 0 : i32
    %c0_i32_0 = arith.constant 0 : i32
    %c0_i32_1 = arith.constant 0 : i32
    return %c0_i32, %c0_i32_0 : i32, i32
  }
  func.func @transform_3(%arg0: i32) -> (i32, i32) {
    %c0_i32 = arith.constant 0 : i32
    %c0_i32_0 = arith.constant 0 : i32
    %c0_i32_1 = arith.constant 0 : i32
    return %c0_i32, %c0_i32_0 : i32, i32
  }
  func.func @transform_4(%arg0: i32) -> (i32, i32) {
    %c0_i32 = arith.constant 0 : i32
    %c0_i32_0 = arith.constant 0 : i32
    %c0_i32_1 = arith.constant 0 : i32
    return %c0_i32, %c0_i32_0 : i32, i32
  }
  func.func @transform_5(%arg0: i32) -> (i32, i32) {
    %c0_i32 = arith.constant 0 : i32
    %c0_i32_0 = arith.constant 0 : i32
    %c0_i32_1 = arith.constant 0 : i32
    return %c0_i32, %c0_i32_0 : i32, i32
  }
  func.func @transform_6(%arg0: i32) -> (i32, i32) {
    %c0_i32 = arith.constant 0 : i32
    %c0_i32_0 = arith.constant 0 : i32
    %c0_i32_1 = arith.constant 0 : i32
    return %c0_i32, %c0_i32_0 : i32, i32
  }
  func.func @transform_7(%arg0: i32) -> (i32, i32) {
    %c0_i32 = arith.constant 0 : i32
    %c0_i32_0 = arith.constant 0 : i32
    %c0_i32_1 = arith.constant 0 : i32
    return %c0_i32, %c0_i32_0 : i32, i32
  }
  func.func @transform_8(%arg0: i32) -> (i32, i32) {
    %c0_i32 = arith.constant 0 : i32
    %c0_i32_0 = arith.constant 0 : i32
    %c0_i32_1 = arith.constant 0 : i32
    return %c0_i32, %c0_i32_0 : i32, i32
  }
  func.func @transform_9(%arg0: i32) -> (i32, i32) {
    %c0_i32 = arith.constant 0 : i32
    %c0_i32_0 = arith.constant 0 : i32
    %c0_i32_1 = arith.constant 0 : i32
    return %c0_i32, %c0_i32_0 : i32, i32
  }
  func.func @transform_10(%arg0: i32) -> (i32, i32) {
    %c0_i32 = arith.constant 0 : i32
    %c0_i32_0 = arith.constant 0 : i32
    %c0_i32_1 = arith.constant 0 : i32
    return %c0_i32, %c0_i32_0 : i32, i32
  }
  func.func @transform_11(%arg0: i32) -> (i32, i32) {
    %c0_i32 = arith.constant 0 : i32
    %c0_i32_0 = arith.constant 0 : i32
    %c0_i32_1 = arith.constant 0 : i32
    return %c0_i32, %c0_i32_0 : i32, i32
  }
  func.func @transform_12(%arg0: i32) -> (i32, i32) {
    %c0_i32 = arith.constant 0 : i32
    %c0_i32_0 = arith.constant 0 : i32
    %c0_i32_1 = arith.constant 0 : i32
    return %c0_i32, %c0_i32_0 : i32, i32
  }
  func.func @transform_13(%arg0: i32) -> (i32, i32) {
    %c0_i32 = arith.constant 0 : i32
    %c0_i32_0 = arith.constant 0 : i32
    %c0_i32_1 = arith.constant 0 : i32
    return %c0_i32, %c0_i32_0 : i32, i32
  }
  func.func @transform_14(%arg0: i32) -> (i32, i32) {
    %c0_i32 = arith.constant 0 : i32
    %c0_i32_0 = arith.constant 0 : i32
    %c0_i32_1 = arith.constant 0 : i32
    return %c0_i32, %c0_i32_0 : i32, i32
  }
  func.func @transform_15(%arg0: i32) -> (i32, i32) {
    %c0_i32 = arith.constant 0 : i32
    %c0_i32_0 = arith.constant 0 : i32
    %c0_i32_1 = arith.constant 0 : i32
    return %c0_i32, %c0_i32_0 : i32, i32
  }
  func.func @transform_16(%arg0: i32) -> (i32, i32) {
    %c0_i32 = arith.constant 0 : i32
    %c0_i32_0 = arith.constant 0 : i32
    %c0_i32_1 = arith.constant 0 : i32
    return %c0_i32, %c0_i32_0 : i32, i32
  }
  func.func @transform_17(%arg0: i32) -> (i32, i32, i32) {
    %c0_i32 = arith.constant 0 : i32
    %c0_i32_0 = arith.constant 0 : i32
    %c0_i32_1 = arith.constant 0 : i32
    return %arg0, %c0_i32, %c0_i32_0 : i32, i32, i32
  }
}

</mosaic_0001>

<llo_original>
// kernel: tpu_custom_call.1
$region0: #{tpu_custom_call.1}
  #allocation0 [shape = 'u32[]', space=smem, size = 0x4, offset = 0x4, fixed_abs, tag = 'smem constant byte address 0x4 - core index']
  #allocation1 [shape = 'u32[144,128]{1,0:T(1,128)}', space=vmem, size = 0x12000, scoped, tag = 'internal scratch']
  %s0 = inlined_call_operand.vmem [shape: f32[2,8,32], index: 0, kind: input, shape index: {}]
  %s1 = inlined_call_operand.vmem [shape: bf16[32,32], index: 1, kind: input, shape index: {}]
  %s2 = inlined_call_operand.vmem [shape: bf16[32,32], index: 2, kind: input, shape index: {}]
  %s3 = inlined_call_operand.hbm [shape: bf16[32,32], index: 3, kind: input, shape index: {}]
  %s4 = inlined_call_operand.hbm [shape: bf16[32,32], index: 4, kind: input, shape index: {}]
  %s5 = inlined_call_operand.vmem [shape: f32[1,32], index: 5, kind: input, shape index: {}]
  %s6 = inlined_call_operand.vmem [shape: f32[1,32], index: 6, kind: input, shape index: {}]
  %s7 = inlined_call_operand.hbm [shape: f32[1,32], index: 7, kind: input, shape index: {}]
  %s8 = inlined_call_operand.hbm [shape: f32[1,32], index: 8, kind: input, shape index: {}]
  %s9 = inlined_call_operand.vmem [shape: bf16[32,64], index: 9, kind: input, shape index: {}]
  %s10 = inlined_call_operand.vmem [shape: f32[1,64], index: 10, kind: input, shape index: {}]
  %s11 = inlined_call_operand.vmem [shape: bf16[64,32], index: 11, kind: input, shape index: {}]
  %s12 = inlined_call_operand.vmem [shape: f32[1,32], index: 12, kind: input, shape index: {}]
  %s13 = inlined_call_operand.vmem [shape: f32[1,32], index: 13, kind: input, shape index: {}]
  %s14 = inlined_call_operand.vmem [shape: f32[1,32], index: 14, kind: input, shape index: {}]
  %s15 = inlined_call_operand.vmem [shape: f32[1,32], index: 15, kind: input, shape index: {}]
  %s16 = inlined_call_operand.vmem [shape: f32[1,32], index: 16, kind: input, shape index: {}]
  %s17 = inlined_call_operand.hbm [shape: f32[2,8,32], index: 17, kind: output, shape index: {}]
  %s18 = sld [smem:[#allocation0]]
  $region94: #{tpu_custom_call.1} parent=0
    _
  %s20 = ssub.s32 1, %s18
  %s21 = scalar_select 0, %s20, %s18
  $region1: #{tpu_custom_call.1} parent=0
    #allocation2 [shape = 'u8[8192]{0}', space=vmem, size = 0x2000, scoped, tag = 'input window, operand 3, single buffered']
    #allocation3 [shape = 's32[1]{0}', space=sflag, size = 0x4, scoped, tag = 'scoped memory for tpu_custom_call.1']
    #allocation4 [shape = 's32[1]{0}', space=sflag, size = 0x4, scoped, tag = 'scoped memory for tpu_custom_call.1']
    #allocation5 [shape = 'u8[8192]{0}', space=vmem, size = 0x2000, scoped, tag = 'input window, operand 4, single buffered']
    #allocation6 [shape = 's32[1]{0}', space=sflag, size = 0x4, scoped, tag = 'scoped memory for tpu_custom_call.1']
    #allocation7 [shape = 'u8[512]{0}', space=vmem, size = 0x400, scoped, tag = 'input window, operand 7, single buffered']
    #allocation8 [shape = 'u8[512]{0}', space=vmem, size = 0x400, scoped, tag = 'input window, operand 8, single buffered']
    #allocation9 [shape = 's32[1]{0}', space=sflag, size = 0x4, scoped, tag = 'scoped memory for tpu_custom_call.1']
    #allocation10 [shape = 'u8[8192]{0}', space=vmem, size = 0x2000, scoped, tag = 'output window, operand 0, single buffered']
    %22 = vsyncpa [#allocation3], 0
    %23 = vsyncpa [#allocation6], 0
    %24 = vsyncpa [#allocation9], 0
    %25 = vsyncpa [#allocation4], 0
    // Predicated region
    $region2: #{tpu_custom_call.1} parent=1 // pred_check
      _
    $region3: #{tpu_custom_call.1} parent=1 // pred_check_branch
      %27 = sbr.rel (0) target = $region5
    $region4: #{tpu_custom_call.1} parent=1 // pred_region
      _
    $region5: #{tpu_custom_call.1} parent=1 // pred_fallthru
      _
    // Predicated region
    $region6: #{tpu_custom_call.1} parent=1 // pred_check
      _
    $region7: #{tpu_custom_call.1} parent=1 // pred_check_branch
      %29 = sbr.rel (0) target = $region9
    $region8: #{tpu_custom_call.1} parent=1 // pred_region
      _
    $region9: #{tpu_custom_call.1} parent=1 // pred_fallthru
      _
    // Predicated region
    $region10: #{tpu_custom_call.1} parent=1 // pred_check
      _
    $region11: #{tpu_custom_call.1} parent=1 // pred_check_branch
      %31 = sbr.rel (0) target = $region13
    $region12: #{tpu_custom_call.1} parent=1 // pred_region
      _
    $region13: #{tpu_custom_call.1} parent=1 // pred_fallthru
      _
    // Predicated region
    $region14: #{tpu_custom_call.1} parent=1 // pred_check
      _
    $region15: #{tpu_custom_call.1} parent=1 // pred_check_branch
      %33 = sbr.rel (0) target = $region17
    $region16: #{tpu_custom_call.1} parent=1 // pred_region
      %s35 = ssub.s32 256, 256
      %36 = vsyncadd [#allocation3], %s35
      %s37 = sshll.u32 [#allocation2], 4
      %s38 = int_to_ptr.vmem [resolvable:$true] %s37
      %43 = dma.hbm_to_vmem [thread:$0]  %s3, 256, %s38, [#allocation3], 64, 64, 4
    $region17: #{tpu_custom_call.1} parent=1 // pred_fallthru
      _
    // Predicated region
    $region18: #{tpu_custom_call.1} parent=1 // pred_check
      _
    $region19: #{tpu_custom_call.1} parent=1 // pred_check_branch
      %45 = sbr.rel (0) target = $region21
    $region20: #{tpu_custom_call.1} parent=1 // pred_region
      %s47 = ssub.s32 256, 256
      %48 = vsyncadd [#allocation6], %s47
      %s49 = sshll.u32 [#allocation5], 4
      %s50 = int_to_ptr.vmem [resolvable:$true] %s49
      %55 = dma.hbm_to_vmem [thread:$0]  %s4, 256, %s50, [#allocation6], 64, 64, 4
    $region21: #{tpu_custom_call.1} parent=1 // pred_fallthru
      _
    // Predicated region
    $region22: #{tpu_custom_call.1} parent=1 // pred_check
      _
    $region23: #{tpu_custom_call.1} parent=1 // pred_check_branch
      %57 = sbr.rel (0) target = $region25
    $region24: #{tpu_custom_call.1} parent=1 // pred_region
      _
    $region25: #{tpu_custom_call.1} parent=1 // pred_fallthru
      _
    // Predicated region
    $region26: #{tpu_custom_call.1} parent=1 // pred_check
      _
    $region27: #{tpu_custom_call.1} parent=1 // pred_check_branch
      %59 = sbr.rel (0) target = $region29
    $region28: #{tpu_custom_call.1} parent=1 // pred_region
      _
    $region29: #{tpu_custom_call.1} parent=1 // pred_fallthru
      _
    // Predicated region
    $region30: #{tpu_custom_call.1} parent=1 // pred_check
      _
    $region31: #{tpu_custom_call.1} parent=1 // pred_check_branch
      %61 = sbr.rel (0) target = $region33
    $region32: #{tpu_custom_call.1} parent=1 // pred_region
      %s63 = ssub.s32 16, 16
      %64 = vsyncadd [#allocation6], %s63
      %s66 = sshll.u32 [#allocation7], 4
      %s67 = int_to_ptr.vmem [resolvable:$true] %s66
      %69 = dma.hbm_to_vmem [thread:$0]  %s7, 16, %s67, [#allocation6]
    $region33: #{tpu_custom_call.1} parent=1 // pred_fallthru
      _
    // Predicated region
    $region34: #{tpu_custom_call.1} parent=1 // pred_check
      _
    $region35: #{tpu_custom_call.1} parent=1 // pred_check_branch
      %71 = sbr.rel (0) target = $region37
    $region36: #{tpu_custom_call.1} parent=1 // pred_region
      %s73 = ssub.s32 16, 16
      %74 = vsyncadd [#allocation9], %s73
      %s76 = sshll.u32 [#allocation8], 4
      %s77 = int_to_ptr.vmem [resolvable:$true] %s76
      %79 = dma.hbm_to_vmem [thread:$0]  %s8, 16, %s77, [#allocation9]
    $region37: #{tpu_custom_call.1} parent=1 // pred_fallthru
      _
    // Predicated region
    $region38: #{tpu_custom_call.1} parent=1 // pred_check
      _
    $region39: #{tpu_custom_call.1} parent=1 // pred_check_branch
      %81 = sbr.rel (0) target = $region41
    $region40: #{tpu_custom_call.1} parent=1 // pred_region
      _
    $region41: #{tpu_custom_call.1} parent=1 // pred_fallthru
      _
    // Predicated region
    $region42: #{tpu_custom_call.1} parent=1 // pred_check
      _
    $region43: #{tpu_custom_call.1} parent=1 // pred_check_branch
      %83 = sbr.rel (0) target = $region45
    $region44: #{tpu_custom_call.1} parent=1 // pred_region
      _
    $region45: #{tpu_custom_call.1} parent=1 // pred_fallthru
      _
    // Predicated region
    $region46: #{tpu_custom_call.1} parent=1 // pred_check
      _
    $region47: #{tpu_custom_call.1} parent=1 // pred_check_branch
      %85 = sbr.rel (0) target = $region49
    $region48: #{tpu_custom_call.1} parent=1 // pred_region
      _
    $region49: #{tpu_custom_call.1} parent=1 // pred_fallthru
      _
    // Predicated region
    $region50: #{tpu_custom_call.1} parent=1 // pred_check
      _
    $region51: #{tpu_custom_call.1} parent=1 // pred_check_branch
      %87 = sbr.rel (0) target = $region53
    $region52: #{tpu_custom_call.1} parent=1 // pred_region
      _
    $region53: #{tpu_custom_call.1} parent=1 // pred_fallthru
      _
    // Predicated region
    $region54: #{tpu_custom_call.1} parent=1 // pred_check
      _
    $region55: #{tpu_custom_call.1} parent=1 // pred_check_branch
      %89 = sbr.rel (0) target = $region57
    $region56: #{tpu_custom_call.1} parent=1 // pred_region
      _
    $region57: #{tpu_custom_call.1} parent=1 // pred_fallthru
      _
    // Predicated region
    $region58: #{tpu_custom_call.1} parent=1 // pred_check
      _
    $region59: #{tpu_custom_call.1} parent=1 // pred_check_branch
      %91 = sbr.rel (0) target = $region61
    $region60: #{tpu_custom_call.1} parent=1 // pred_region
      _
    $region61: #{tpu_custom_call.1} parent=1 // pred_fallthru
      _
    // Predicated region
    $region62: #{tpu_custom_call.1} parent=1 // pred_check
      _
    $region63: #{tpu_custom_call.1} parent=1 // pred_check_branch
      %93 = sbr.rel (0) target = $region65
    $region64: #{tpu_custom_call.1} parent=1 // pred_region
      _
    $region65: #{tpu_custom_call.1} parent=1 // pred_fallthru
      _
    // Predicated region
    $region66: #{tpu_custom_call.1} parent=1 // pred_check
      _
    $region67: #{tpu_custom_call.1} parent=1 // pred_check_branch
      %95 = sbr.rel (0) target = $region69
    $region68: #{tpu_custom_call.1} parent=1 // pred_region
      _
    $region69: #{tpu_custom_call.1} parent=1 // pred_fallthru
      _
    // Predicated region
    $region70: #{tpu_custom_call.1} parent=1 // pred_check
      _
    $region71: #{tpu_custom_call.1} parent=1 // pred_check_branch
      %97 = sbr.rel (0) target = $region73
    $region72: #{tpu_custom_call.1} parent=1 // pred_region
      %98 = dma.done [#allocation3], 256
    $region73: #{tpu_custom_call.1} parent=1 // pred_fallthru
      _
    // Predicated region
    $region74: #{tpu_custom_call.1} parent=1 // pred_check
      _
    $region75: #{tpu_custom_call.1} parent=1 // pred_check_branch
      %100 = sbr.rel (0) target = $region77
    $region76: #{tpu_custom_call.1} parent=1 // pred_region
      %101 = dma.done [#allocation6], 256
    $region77: #{tpu_custom_call.1} parent=1 // pred_fallthru
      _
    // Predicated region
    $region78: #{tpu_custom_call.1} parent=1 // pred_check
      _
    $region79: #{tpu_custom_call.1} parent=1 // pred_check_branch
      %103 = sbr.rel (0) target = $region81
    $region80: #{tpu_custom_call.1} parent=1 // pred_region
      %104 = dma.done [#allocation6], 16
    $region81: #{tpu_custom_call.1} parent=1 // pred_fallthru
      _
    // Predicated region
    $region82: #{tpu_custom_call.1} parent=1 // pred_check
      _
    $region83: #{tpu_custom_call.1} parent=1 // pred_check_branch
      %106 = sbr.rel (0) target = $region85
    $region84: #{tpu_custom_call.1} parent=1 // pred_region
      %107 = dma.done [#allocation9], 16
    $region85: #{tpu_custom_call.1} parent=1 // pred_fallthru
      _
    %v109 = vld [vmem:[%s0] sm:$0xff]
    %v110 = vld [vmem:[%s0 + $0x8] sm:$0xff]
    %v111 = vpack.c.bf16 %v110, %v109
    %v112 = vld [vmem:[%s1] sm:$0xf]
    %v113 = vld [vmem:[%s1 + $0x4] sm:$0xf]
    %v114 = vld [vmem:[%s1 + $0x8] sm:$0xf]
    %v115 = vld [vmem:[%s1 + $0xc] sm:$0xf]
    %v116 = vld [vmem:[%s5] sm:$0x1]
    %v118 = vlaneseq
    %v119 = vshrl.u32 %v118, 7
    %v120 = vsub.s32 0, %v119
    %v121 = vrot.slane %v116, %v120
    %v127 = vunpack.c.l.b16 %v112
    %v128 = vunpack.c.l.b16 %v113
    %v129 = vunpack.c.l.b16 %v114
    %v130 = vunpack.c.l.b16 %v115
    %v131 = vpack.c.b16 %v128, %v127
    %v132 = vpack.c.b16 %v130, %v129
    %vm135 = vcmask 261120
    %v137 = vsel %vm135, %v111, 0
    %139 = vmatprep.subr.bf16.mxu0 0
    %140 = vmatpush1.bf16.msra.mxu0 %v131
    %141 = vmatprep.subr.bf16.mxu0 0
    %142 = vmatpush1.bf16.msra.mxu0 %v132
    %143 = vmatprep.subr.bf16.mxu0 0
    %144 = vmatpush1.bf16.msra.mxu0 0
    %145 = vmatprep.subr.bf16.mxu0 0
    %146 = vmatpush1.bf16.msra.mxu0 0
    %147 = vmatprep.subr.bf16.mxu0 0
    %148 = vmatpush1.bf16.msra.mxu0 0
    %149 = vmatprep.subr.bf16.mxu0 0
    %150 = vmatpush1.bf16.msra.mxu0 0
    %151 = vmatprep.subr.bf16.mxu0 0
    %152 = vmatpush1.bf16.msra.mxu0 0
    %153 = vmatprep.subr.bf16.mxu0 0
    %154 = vmatpush1.bf16.msra.mxu0 0
    %155 = vmatprep.subr.bf16.mxu0 0
    %156 = vmatpush1.bf16.msra.mxu0 0
    %157 = vmatprep.subr.bf16.mxu0 0
    %158 = vmatpush1.bf16.msra.mxu0 0
    %159 = vmatprep.subr.bf16.mxu0 0
    %160 = vmatpush1.bf16.msra.mxu0 0
    %161 = vmatprep.subr.bf16.mxu0 0
    %162 = vmatpush1.bf16.msra.mxu0 0
    %163 = vmatprep.subr.bf16.mxu0 0
    %164 = vmatpush1.bf16.msra.mxu0 0
    %165 = vmatprep.subr.bf16.mxu0 0
    %166 = vmatpush1.bf16.msra.mxu0 0
    %167 = vmatprep.subr.bf16.mxu0 0
    %168 = vmatpush1.bf16.msra.mxu0 0
    %169 = vmatprep.subr.bf16.mxu0 0
    %170 = vmatpush1.bf16.msra.mxu0 0
    %171 = vmatprep.mubr.bf16.mxu0 0
    %172 = vmatmul.mubr.bf16.gmra.mrb[0].mxu0 %v137
    %v173 = vpop.f32.mrb[0].mxu0
    %v174 = vadd.f32 %v121, %v173
    %v175 = vpop.f32.mrb[0].mxu0
    %v176 = vpop.f32.mrb[0].mxu0
    %v177 = vadd.f32 %v121, %v176
    %v178 = vpop.f32.mrb[0].mxu0
    %179 = vdwg.mxu0
    %v180 = vpack.c.bf16 %v177, %v174
    %v182 = vunpack.c.l.b16 %v180
    %v183 = vunpack.c.h.b16 %v180
    %v184 = vpack.c.b16 %v182, %v182
    %v185 = vpack.c.b16 %v183, %v183
    %v186 = vld [vmem:[%s2] sm:$0xf]
    %v187 = vld [vmem:[%s2 + $0x4] sm:$0xf]
    %v188 = vld [vmem:[%s2 + $0x8] sm:$0xf]
    %v189 = vld [vmem:[%s2 + $0xc] sm:$0xf]
    %v190 = vld [vmem:[%s6] sm:$0x1]
    %v192 = vlaneseq
    %v193 = vshrl.u32 %v192, 7
    %v194 = vsub.s32 0, %v193
    %v195 = vrot.slane %v190, %v194
    %v201 = vunpack.c.l.b16 %v186
    %v202 = vunpack.c.l.b16 %v187
    %v203 = vunpack.c.l.b16 %v188
    %v204 = vunpack.c.l.b16 %v189
    %v205 = vpack.c.b16 %v202, %v201
    %v206 = vpack.c.b16 %v204, %v203
    %209 = vmatprep.subr.bf16.mxu0 0
    %210 = vmatpush1.bf16.msra.mxu0 %v205
    %211 = vmatprep.subr.bf16.mxu0 0
    %212 = vmatpush1.bf16.msra.mxu0 %v206
    %213 = vmatprep.subr.bf16.mxu0 0
    %214 = vmatpush1.bf16.msra.mxu0 0
    %215 = vmatprep.subr.bf16.mxu0 0
    %216 = vmatpush1.bf16.msra.mxu0 0
    %217 = vmatprep.subr.bf16.mxu0 0
    %218 = vmatpush1.bf16.msra.mxu0 0
    %219 = vmatprep.subr.bf16.mxu0 0
    %220 = vmatpush1.bf16.msra.mxu0 0
    %221 = vmatprep.subr.bf16.mxu0 0
    %222 = vmatpush1.bf16.msra.mxu0 0
    %223 = vmatprep.subr.bf16.mxu0 0
    %224 = vmatpush1.bf16.msra.mxu0 0
    %225 = vmatprep.subr.bf16.mxu0 0
    %226 = vmatpush1.bf16.msra.mxu0 0
    %227 = vmatprep.subr.bf16.mxu0 0
    %228 = vmatpush1.bf16.msra.mxu0 0
    %229 = vmatprep.subr.bf16.mxu0 0
    %230 = vmatpush1.bf16.msra.mxu0 0
    %231 = vmatprep.subr.bf16.mxu0 0
    %232 = vmatpush1.bf16.msra.mxu0 0
    %233 = vmatprep.subr.bf16.mxu0 0
    %234 = vmatpush1.bf16.msra.mxu0 0
    %235 = vmatprep.subr.bf16.mxu0 0
    %236 = vmatpush1.bf16.msra.mxu0 0
    %237 = vmatprep.subr.bf16.mxu0 0
    %238 = vmatpush1.bf16.msra.mxu0 0
    %239 = vmatprep.subr.bf16.mxu0 0
    %240 = vmatpush1.bf16.msra.mxu0 0
    %241 = vmatprep.mubr.bf16.mxu0 0
    %242 = vmatmul.mubr.bf16.gmra.mrb[0].mxu0 %v137
    %v243 = vpop.f32.mrb[0].mxu0
    %v244 = vadd.f32 %v195, %v243
    %v245 = vpop.f32.mrb[0].mxu0
    %v246 = vpop.f32.mrb[0].mxu0
    %v247 = vadd.f32 %v195, %v246
    %v248 = vpop.f32.mrb[0].mxu0
    %249 = vdwg.mxu0
    %v250 = vpack.c.bf16 %v247, %v244
    %v252 = vunpack.c.l.b16 %v250
    %v253 = vunpack.c.h.b16 %v250
    %v254 = vpack.c.b16 %v252, %v252
    %v255 = vpack.c.b16 %v253, %v253
    %v256 = vld [vmem:[#allocation2] sm:$0xf]
    %v257 = vld [vmem:[#allocation2 + $0x4] sm:$0xf]
    %v258 = vld [vmem:[#allocation2 + $0x8] sm:$0xf]
    %v259 = vld [vmem:[#allocation2 + $0xc] sm:$0xf]
    %v260 = vld [vmem:[#allocation7] sm:$0x1]
    %v262 = vlaneseq
    %v263 = vshrl.u32 %v262, 7
    %v264 = vsub.s32 0, %v263
    %v265 = vrot.slane %v260, %v264
    %v271 = vunpack.c.l.b16 %v256
    %v272 = vunpack.c.l.b16 %v257
    %v273 = vunpack.c.l.b16 %v258
    %v274 = vunpack.c.l.b16 %v259
    %v275 = vpack.c.b16 %v272, %v271
    %v276 = vpack.c.b16 %v274, %v273
    %279 = vmatprep.subr.bf16.mxu0 0
    %280 = vmatpush1.bf16.msra.mxu0 %v275
    %281 = vmatprep.subr.bf16.mxu0 0
    %282 = vmatpush1.bf16.msra.mxu0 %v276
    %283 = vmatprep.subr.bf16.mxu0 0
    %284 = vmatpush1.bf16.msra.mxu0 0
    %285 = vmatprep.subr.bf16.mxu0 0
    %286 = vmatpush1.bf16.msra.mxu0 0
    %287 = vmatprep.subr.bf16.mxu0 0
    %288 = vmatpush1.bf16.msra.mxu0 0
    %289 = vmatprep.subr.bf16.mxu0 0
    %290 = vmatpush1.bf16.msra.mxu0 0
    %291 = vmatprep.subr.bf16.mxu0 0
    %292 = vmatpush1.bf16.msra.mxu0 0
    %293 = vmatprep.subr.bf16.mxu0 0
    %294 = vmatpush1.bf16.msra.mxu0 0
    %295 = vmatprep.subr.bf16.mxu0 0
    %296 = vmatpush1.bf16.msra.mxu0 0
    %297 = vmatprep.subr.bf16.mxu0 0
    %298 = vmatpush1.bf16.msra.mxu0 0
    %299 = vmatprep.subr.bf16.mxu0 0
    %300 = vmatpush1.bf16.msra.mxu0 0
    %301 = vmatprep.subr.bf16.mxu0 0
    %302 = vmatpush1.bf16.msra.mxu0 0
    %303 = vmatprep.subr.bf16.mxu0 0
    %304 = vmatpush1.bf16.msra.mxu0 0
    %305 = vmatprep.subr.bf16.mxu0 0
    %306 = vmatpush1.bf16.msra.mxu0 0
    %307 = vmatprep.subr.bf16.mxu0 0
    %308 = vmatpush1.bf16.msra.mxu0 0
    %309 = vmatprep.subr.bf16.mxu0 0
    %310 = vmatpush1.bf16.msra.mxu0 0
    %311 = vmatprep.mubr.bf16.mxu0 0
    %312 = vmatmul.mubr.bf16.gmra.mrb[0].mxu0 %v137
    %v313 = vpop.f32.mrb[0].mxu0
    %v314 = vadd.f32 %v265, %v313
    %v315 = vpop.f32.mrb[0].mxu0
    %v316 = vpop.f32.mrb[0].mxu0
    %v317 = vadd.f32 %v265, %v316
    %v318 = vpop.f32.mrb[0].mxu0
    %319 = vdwg.mxu0
    %v320 = vpack.c.bf16 %v317, %v314
    %v322 = vunpack.c.l.b16 %v320
    %v323 = vunpack.c.h.b16 %v320
    %v324 = vpack.c.b16 %v322, %v322
    %v325 = vpack.c.b16 %v323, %v323
    %326 = vrot.lane.b32.xlu0 %v184, 120
    %v327 = vpop.permute.xlu0 %326
    %328 = vrot.lane.b32.xlu0 %v185, 120
    %v329 = vpop.permute.xlu0 %328
    %330 = vrot.lane.b32.xlu0 %v184, 112
    %v331 = vpop.permute.xlu0 %330
    %332 = vrot.lane.b32.xlu0 %v185, 112
    %v333 = vpop.permute.xlu0 %332
    %334 = vrot.lane.b32.xlu0 %v184, 104
    %v335 = vpop.permute.xlu0 %334
    %336 = vrot.lane.b32.xlu0 %v185, 104
    %v337 = vpop.permute.xlu0 %336
    %338 = vrot.lane.b32.xlu0 %v254, 120
    %v339 = vpop.permute.xlu0 %338
    %340 = vrot.lane.b32.xlu0 %v255, 120
    %v341 = vpop.permute.xlu0 %340
    %342 = vrot.lane.b32.xlu0 %v254, 112
    %v343 = vpop.permute.xlu0 %342
    %344 = vrot.lane.b32.xlu0 %v255, 112
    %v345 = vpop.permute.xlu0 %344
    %346 = vrot.lane.b32.xlu0 %v254, 104
    %v347 = vpop.permute.xlu0 %346
    %348 = vrot.lane.b32.xlu0 %v255, 104
    %v349 = vpop.permute.xlu0 %348
    %350 = vrot.lane.b32.xlu0 %v324, 120
    %v351 = vpop.permute.xlu0 %350
    %352 = vrot.lane.b32.xlu0 %v325, 120
    %v353 = vpop.permute.xlu0 %352
    %354 = vrot.lane.b32.xlu0 %v324, 112
    %v355 = vpop.permute.xlu0 %354
    %356 = vrot.lane.b32.xlu0 %v325, 112
    %v357 = vpop.permute.xlu0 %356
    %358 = vrot.lane.b32.xlu0 %v324, 104
    %v359 = vpop.permute.xlu0 %358
    %360 = vrot.lane.b32.xlu0 %v325, 104
    %v361 = vpop.permute.xlu0 %360
    %vm362 = vcmask 64512
    %v364 = vsel %vm362, %v184, 0
    %v367 = vsel %vm362, %v254, 0
    %369 = vmatprep.subr.bf16.mxu0 0
    %370 = vmatpush1.bf16.xpose.msra.mxu0 %v367
    %371 = vmatprep.subr.bf16.mxu0 0
    %372 = vmatpush1.bf16.xpose.msra.mxu0 0
    %373 = vmatprep.subr.bf16.mxu0 0
    %374 = vmatpush1.bf16.xpose.msra.mxu0 0
    %375 = vmatprep.subr.bf16.mxu0 0
    %376 = vmatpush1.bf16.xpose.msra.mxu0 0
    %377 = vmatprep.subr.bf16.mxu0 0
    %378 = vmatpush1.bf16.xpose.msra.mxu0 0
    %379 = vmatprep.subr.bf16.mxu0 0
    %380 = vmatpush1.bf16.xpose.msra.mxu0 0
    %381 = vmatprep.subr.bf16.mxu0 0
    %382 = vmatpush1.bf16.xpose.msra.mxu0 0
    %383 = vmatprep.subr.bf16.mxu0 0
    %384 = vmatpush1.bf16.xpose.msra.mxu0 0
    %385 = vmatprep.subr.bf16.mxu0 0
    %386 = vmatpush1.bf16.xpose.msra.mxu0 0
    %387 = vmatprep.subr.bf16.mxu0 0
    %388 = vmatpush1.bf16.xpose.msra.mxu0 0
    %389 = vmatprep.subr.bf16.mxu0 0
    %390 = vmatpush1.bf16.xpose.msra.mxu0 0
    %391 = vmatprep.subr.bf16.mxu0 0
    %392 = vmatpush1.bf16.xpose.msra.mxu0 0
    %393 = vmatprep.subr.bf16.mxu0 0
    %394 = vmatpush1.bf16.xpose.msra.mxu0 0
    %395 = vmatprep.subr.bf16.mxu0 0
    %396 = vmatpush1.bf16.xpose.msra.mxu0 0
    %397 = vmatprep.subr.bf16.mxu0 0
    %398 = vmatpush1.bf16.xpose.msra.mxu0 0
    %399 = vmatprep.subr.bf16.mxu0 0
    %400 = vmatpush1.bf16.xpose.msra.mxu0 0
    %401 = vmatprep.mubr.bf16.mxu0 0
    %402 = vmatmul.mubr.bf16.gmra.mrb[0].mxu0 %v364
    %v403 = vpop.f32.mrb[0].mxu0
    %v404 = vadd.f32 0.0, %v403
    %v405 = vpop.f32.mrb[0].mxu0
    %v406 = vpop.f32.mrb[0].mxu0
    %v407 = vpop.f32.mrb[0].mxu0
    %408 = vdwg.mxu0
    %v410 = vsel %vm362, %v185, 0
    %v413 = vsel %vm362, %v255, 0
    %415 = vmatprep.subr.bf16.mxu0 0
    %416 = vmatpush1.bf16.xpose.msra.mxu0 %v413
    %417 = vmatprep.subr.bf16.mxu0 0
    %418 = vmatpush1.bf16.xpose.msra.mxu0 0
    %419 = vmatprep.subr.bf16.mxu0 0
    %420 = vmatpush1.bf16.xpose.msra.mxu0 0
    %421 = vmatprep.subr.bf16.mxu0 0
    %422 = vmatpush1.bf16.xpose.msra.mxu0 0
    %423 = vmatprep.subr.bf16.mxu0 0
    %424 = vmatpush1.bf16.xpose.msra.mxu0 0
    %425 = vmatprep.subr.bf16.mxu0 0
    %426 = vmatpush1.bf16.xpose.msra.mxu0 0
    %427 = vmatprep.subr.bf16.mxu0 0
    %428 = vmatpush1.bf16.xpose.msra.mxu0 0
    %429 = vmatprep.subr.bf16.mxu0 0
    %430 = vmatpush1.bf16.xpose.msra.mxu0 0
    %431 = vmatprep.subr.bf16.mxu0 0
    %432 = vmatpush1.bf16.xpose.msra.mxu0 0
    %433 = vmatprep.subr.bf16.mxu0 0
    %434 = vmatpush1.bf16.xpose.msra.mxu0 0
    %435 = vmatprep.subr.bf16.mxu0 0
    %436 = vmatpush1.bf16.xpose.msra.mxu0 0
    %437 = vmatprep.subr.bf16.mxu0 0
    %438 = vmatpush1.bf16.xpose.msra.mxu0 0
    %439 = vmatprep.subr.bf16.mxu0 0
    %440 = vmatpush1.bf16.xpose.msra.mxu0 0
    %441 = vmatprep.subr.bf16.mxu0 0
    %442 = vmatpush1.bf16.xpose.msra.mxu0 0
    %443 = vmatprep.subr.bf16.mxu0 0
    %444 = vmatpush1.bf16.xpose.msra.mxu0 0
    %445 = vmatprep.subr.bf16.mxu0 0
    %446 = vmatpush1.bf16.xpose.msra.mxu0 0
    %447 = vmatprep.mubr.bf16.mxu0 0
    %448 = vmatmul.mubr.bf16.gmra.mrb[0].mxu0 %v410
    %v449 = vpop.f32.mrb[0].mxu0
    %v450 = vadd.f32 0.0, %v449
    %v451 = vpop.f32.mrb[0].mxu0
    %v452 = vpop.f32.mrb[0].mxu0
    %v453 = vpop.f32.mrb[0].mxu0
    %454 = vdwg.mxu0
    %v456 = vsel %vm362, %v327, 0
    %v459 = vsel %vm362, %v339, 0
    %461 = vmatprep.subr.bf16.mxu0 0
    %462 = vmatpush1.bf16.xpose.msra.mxu0 %v459
    %463 = vmatprep.subr.bf16.mxu0 0
    %464 = vmatpush1.bf16.xpose.msra.mxu0 0
    %465 = vmatprep.subr.bf16.mxu0 0
    %466 = vmatpush1.bf16.xpose.msra.mxu0 0
    %467 = vmatprep.subr.bf16.mxu0 0
    %468 = vmatpush1.bf16.xpose.msra.mxu0 0
    %469 = vmatprep.subr.bf16.mxu0 0
    %470 = vmatpush1.bf16.xpose.msra.mxu0 0
    %471 = vmatprep.subr.bf16.mxu0 0
    %472 = vmatpush1.bf16.xpose.msra.mxu0 0
    %473 = vmatprep.subr.bf16.mxu0 0
    %474 = vmatpush1.bf16.xpose.msra.mxu0 0
    %475 = vmatprep.subr.bf16.mxu0 0
    %476 = vmatpush1.bf16.xpose.msra.mxu0 0
    %477 = vmatprep.subr.bf16.mxu0 0
    %478 = vmatpush1.bf16.xpose.msra.mxu0 0
    %479 = vmatprep.subr.bf16.mxu0 0
    %480 = vmatpush1.bf16.xpose.msra.mxu0 0
    %481 = vmatprep.subr.bf16.mxu0 0
    %482 = vmatpush1.bf16.xpose.msra.mxu0 0
    %483 = vmatprep.subr.bf16.mxu0 0
    %484 = vmatpush1.bf16.xpose.msra.mxu0 0
    %485 = vmatprep.subr.bf16.mxu0 0
    %486 = vmatpush1.bf16.xpose.msra.mxu0 0
    %487 = vmatprep.subr.bf16.mxu0 0
    %488 = vmatpush1.bf16.xpose.msra.mxu0 0
    %489 = vmatprep.subr.bf16.mxu0 0
    %490 = vmatpush1.bf16.xpose.msra.mxu0 0
    %491 = vmatprep.subr.bf16.mxu0 0
    %492 = vmatpush1.bf16.xpose.msra.mxu0 0
    %493 = vmatprep.mubr.bf16.mxu0 0
    %494 = vmatmul.mubr.bf16.gmra.mrb[0].mxu0 %v456
    %v495 = vpop.f32.mrb[0].mxu0
    %v496 = vadd.f32 0.0, %v495
    %v497 = vpop.f32.mrb[0].mxu0
    %v498 = vpop.f32.mrb[0].mxu0
    %v499 = vpop.f32.mrb[0].mxu0
    %500 = vdwg.mxu0
    %v502 = vsel %vm362, %v329, 0
    %v505 = vsel %vm362, %v341, 0
    %507 = vmatprep.subr.bf16.mxu0 0
    %508 = vmatpush1.bf16.xpose.msra.mxu0 %v505
    %509 = vmatprep.subr.bf16.mxu0 0
    %510 = vmatpush1.bf16.xpose.msra.mxu0 0
    %511 = vmatprep.subr.bf16.mxu0 0
    %512 = vmatpush1.bf16.xpose.msra.mxu0 0
    %513 = vmatprep.subr.bf16.mxu0 0
    %514 = vmatpush1.bf16.xpose.msra.mxu0 0
    %515 = vmatprep.subr.bf16.mxu0 0
    %516 = vmatpush1.bf16.xpose.msra.mxu0 0
    %517 = vmatprep.subr.bf16.mxu0 0
    %518 = vmatpush1.bf16.xpose.msra.mxu0 0
    %519 = vmatprep.subr.bf16.mxu0 0
    %520 = vmatpush1.bf16.xpose.msra.mxu0 0
    %521 = vmatprep.subr.bf16.mxu0 0
    %522 = vmatpush1.bf16.xpose.msra.mxu0 0
    %523 = vmatprep.subr.bf16.mxu0 0
    %524 = vmatpush1.bf16.xpose.msra.mxu0 0
    %525 = vmatprep.subr.bf16.mxu0 0
    %526 = vmatpush1.bf16.xpose.msra.mxu0 0
    %527 = vmatprep.subr.bf16.mxu0 0
    %528 = vmatpush1.bf16.xpose.msra.mxu0 0
    %529 = vmatprep.subr.bf16.mxu0 0
    %530 = vmatpush1.bf16.xpose.msra.mxu0 0
    %531 = vmatprep.subr.bf16.mxu0 0
    %532 = vmatpush1.bf16.xpose.msra.mxu0 0
    %533 = vmatprep.subr.bf16.mxu0 0
    %534 = vmatpush1.bf16.xpose.msra.mxu0 0
    %535 = vmatprep.subr.bf16.mxu0 0
    %536 = vmatpush1.bf16.xpose.msra.mxu0 0
    %537 = vmatprep.subr.bf16.mxu0 0
    %538 = vmatpush1.bf16.xpose.msra.mxu0 0
    %539 = vmatprep.mubr.bf16.mxu0 0
    %540 = vmatmul.mubr.bf16.gmra.mrb[0].mxu0 %v502
    %v541 = vpop.f32.mrb[0].mxu0
    %v542 = vadd.f32 0.0, %v541
    %v543 = vpop.f32.mrb[0].mxu0
    %v544 = vpop.f32.mrb[0].mxu0
    %v545 = vpop.f32.mrb[0].mxu0
    %546 = vdwg.mxu0
    %v548 = vsel %vm362, %v331, 0
    %v551 = vsel %vm362, %v343, 0
    %553 = vmatprep.subr.bf16.mxu0 0
    %554 = vmatpush1.bf16.xpose.msra.mxu0 %v551
    %555 = vmatprep.subr.bf16.mxu0 0
    %556 = vmatpush1.bf16.xpose.msra.mxu0 0
    %557 = vmatprep.subr.bf16.mxu0 0
    %558 = vmatpush1.bf16.xpose.msra.mxu0 0
    %559 = vmatprep.subr.bf16.mxu0 0
    %560 = vmatpush1.bf16.xpose.msra.mxu0 0
    %561 = vmatprep.subr.bf16.mxu0 0
    %562 = vmatpush1.bf16.xpose.msra.mxu0 0
    %563 = vmatprep.subr.bf16.mxu0 0
    %564 = vmatpush1.bf16.xpose.msra.mxu0 0
    %565 = vmatprep.subr.bf16.mxu0 0
    %566 = vmatpush1.bf16.xpose.msra.mxu0 0
    %567 = vmatprep.subr.bf16.mxu0 0
    %568 = vmatpush1.bf16.xpose.msra.mxu0 0
    %569 = vmatprep.subr.bf16.mxu0 0
    %570 = vmatpush1.bf16.xpose.msra.mxu0 0
    %571 = vmatprep.subr.bf16.mxu0 0
    %572 = vmatpush1.bf16.xpose.msra.mxu0 0
    %573 = vmatprep.subr.bf16.mxu0 0
    %574 = vmatpush1.bf16.xpose.msra.mxu0 0
    %575 = vmatprep.subr.bf16.mxu0 0
    %576 = vmatpush1.bf16.xpose.msra.mxu0 0
    %577 = vmatprep.subr.bf16.mxu0 0
    %578 = vmatpush1.bf16.xpose.msra.mxu0 0
    %579 = vmatprep.subr.bf16.mxu0 0
    %580 = vmatpush1.bf16.xpose.msra.mxu0 0
    %581 = vmatprep.subr.bf16.mxu0 0
    %582 = vmatpush1.bf16.xpose.msra.mxu0 0
    %583 = vmatprep.subr.bf16.mxu0 0
    %584 = vmatpush1.bf16.xpose.msra.mxu0 0
    %585 = vmatprep.mubr.bf16.mxu0 0
    %586 = vmatmul.mubr.bf16.gmra.mrb[0].mxu0 %v548
    %v587 = vpop.f32.mrb[0].mxu0
    %v588 = vadd.f32 0.0, %v587
    %v589 = vpop.f32.mrb[0].mxu0
    %v590 = vpop.f32.mrb[0].mxu0
    %v591 = vpop.f32.mrb[0].mxu0
    %592 = vdwg.mxu0
    %v594 = vsel %vm362, %v333, 0
    %v597 = vsel %vm362, %v345, 0
    %599 = vmatprep.subr.bf16.mxu0 0
    %600 = vmatpush1.bf16.xpose.msra.mxu0 %v597
    %601 = vmatprep.subr.bf16.mxu0 0
    %602 = vmatpush1.bf16.xpose.msra.mxu0 0
    %603 = vmatprep.subr.bf16.mxu0 0
    %604 = vmatpush1.bf16.xpose.msra.mxu0 0
    %605 = vmatprep.subr.bf16.mxu0 0
    %606 = vmatpush1.bf16.xpose.msra.mxu0 0
    %607 = vmatprep.subr.bf16.mxu0 0
    %608 = vmatpush1.bf16.xpose.msra.mxu0 0
    %609 = vmatprep.subr.bf16.mxu0 0
    %610 = vmatpush1.bf16.xpose.msra.mxu0 0
    %611 = vmatprep.subr.bf16.mxu0 0
    %612 = vmatpush1.bf16.xpose.msra.mxu0 0
    %613 = vmatprep.subr.bf16.mxu0 0
    %614 = vmatpush1.bf16.xpose.msra.mxu0 0
    %615 = vmatprep.subr.bf16.mxu0 0
    %616 = vmatpush1.bf16.xpose.msra.mxu0 0
    %617 = vmatprep.subr.bf16.mxu0 0
    %618 = vmatpush1.bf16.xpose.msra.mxu0 0
    %619 = vmatprep.subr.bf16.mxu0 0
    %620 = vmatpush1.bf16.xpose.msra.mxu0 0
    %621 = vmatprep.subr.bf16.mxu0 0
    %622 = vmatpush1.bf16.xpose.msra.mxu0 0
    %623 = vmatprep.subr.bf16.mxu0 0
    %624 = vmatpush1.bf16.xpose.msra.mxu0 0
    %625 = vmatprep.subr.bf16.mxu0 0
    %626 = vmatpush1.bf16.xpose.msra.mxu0 0
    %627 = vmatprep.subr.bf16.mxu0 0
    %628 = vmatpush1.bf16.xpose.msra.mxu0 0
    %629 = vmatprep.subr.bf16.mxu0 0
    %630 = vmatpush1.bf16.xpose.msra.mxu0 0
    %631 = vmatprep.mubr.bf16.mxu0 0
    %632 = vmatmul.mubr.bf16.gmra.mrb[0].mxu0 %v594
    %v633 = vpop.f32.mrb[0].mxu0
    %v634 = vadd.f32 0.0, %v633
    %v635 = vpop.f32.mrb[0].mxu0
    %v636 = vpop.f32.mrb[0].mxu0
    %v637 = vpop.f32.mrb[0].mxu0
    %638 = vdwg.mxu0
    %v640 = vsel %vm362, %v335, 0
    %v643 = vsel %vm362, %v347, 0
    %645 = vmatprep.subr.bf16.mxu0 0
    %646 = vmatpush1.bf16.xpose.msra.mxu0 %v643
    %647 = vmatprep.subr.bf16.mxu0 0
    %648 = vmatpush1.bf16.xpose.msra.mxu0 0
    %649 = vmatprep.subr.bf16.mxu0 0
    %650 = vmatpush1.bf16.xpose.msra.mxu0 0
    %651 = vmatprep.subr.bf16.mxu0 0
    %652 = vmatpush1.bf16.xpose.msra.mxu0 0
    %653 = vmatprep.subr.bf16.mxu0 0
    %654 = vmatpush1.bf16.xpose.msra.mxu0 0
    %655 = vmatprep.subr.bf16.mxu0 0
    %656 = vmatpush1.bf16.xpose.msra.mxu0 0
    %657 = vmatprep.subr.bf16.mxu0 0
    %658 = vmatpush1.bf16.xpose.msra.mxu0 0
    %659 = vmatprep.subr.bf16.mxu0 0
    %660 = vmatpush1.bf16.xpose.msra.mxu0 0
    %661 = vmatprep.subr.bf16.mxu0 0
    %662 = vmatpush1.bf16.xpose.msra.mxu0 0
    %663 = vmatprep.subr.bf16.mxu0 0
    %664 = vmatpush1.bf16.xpose.msra.mxu0 0
    %665 = vmatprep.subr.bf16.mxu0 0
    %666 = vmatpush1.bf16.xpose.msra.mxu0 0
    %667 = vmatprep.subr.bf16.mxu0 0
    %668 = vmatpush1.bf16.xpose.msra.mxu0 0
    %669 = vmatprep.subr.bf16.mxu0 0
    %670 = vmatpush1.bf16.xpose.msra.mxu0 0
    %671 = vmatprep.subr.bf16.mxu0 0
    %672 = vmatpush1.bf16.xpose.msra.mxu0 0
    %673 = vmatprep.subr.bf16.mxu0 0
    %674 = vmatpush1.bf16.xpose.msra.mxu0 0
    %675 = vmatprep.subr.bf16.mxu0 0
    %676 = vmatpush1.bf16.xpose.msra.mxu0 0
    %677 = vmatprep.mubr.bf16.mxu0 0
    %678 = vmatmul.mubr.bf16.gmra.mrb[0].mxu0 %v640
    %v679 = vpop.f32.mrb[0].mxu0
    %v680 = vadd.f32 0.0, %v679
    %v681 = vpop.f32.mrb[0].mxu0
    %v682 = vpop.f32.mrb[0].mxu0
    %v683 = vpop.f32.mrb[0].mxu0
    %684 = vdwg.mxu0
    %v686 = vsel %vm362, %v337, 0
    %v689 = vsel %vm362, %v349, 0
    %691 = vmatprep.subr.bf16.mxu0 0
    %692 = vmatpush1.bf16.xpose.msra.mxu0 %v689
    %693 = vmatprep.subr.bf16.mxu0 0
    %694 = vmatpush1.bf16.xpose.msra.mxu0 0
    %695 = vmatprep.subr.bf16.mxu0 0
    %696 = vmatpush1.bf16.xpose.msra.mxu0 0
    %697 = vmatprep.subr.bf16.mxu0 0
    %698 = vmatpush1.bf16.xpose.msra.mxu0 0
    %699 = vmatprep.subr.bf16.mxu0 0
    %700 = vmatpush1.bf16.xpose.msra.mxu0 0
    %701 = vmatprep.subr.bf16.mxu0 0
    %702 = vmatpush1.bf16.xpose.msra.mxu0 0
    %703 = vmatprep.subr.bf16.mxu0 0
    %704 = vmatpush1.bf16.xpose.msra.mxu0 0
    %705 = vmatprep.subr.bf16.mxu0 0
    %706 = vmatpush1.bf16.xpose.msra.mxu0 0
    %707 = vmatprep.subr.bf16.mxu0 0
    %708 = vmatpush1.bf16.xpose.msra.mxu0 0
    %709 = vmatprep.subr.bf16.mxu0 0
    %710 = vmatpush1.bf16.xpose.msra.mxu0 0
    %711 = vmatprep.subr.bf16.mxu0 0
    %712 = vmatpush1.bf16.xpose.msra.mxu0 0
    %713 = vmatprep.subr.bf16.mxu0 0
    %714 = vmatpush1.bf16.xpose.msra.mxu0 0
    %715 = vmatprep.subr.bf16.mxu0 0
    %716 = vmatpush1.bf16.xpose.msra.mxu0 0
    %717 = vmatprep.subr.bf16.mxu0 0
    %718 = vmatpush1.bf16.xpose.msra.mxu0 0
    %719 = vmatprep.subr.bf16.mxu0 0
    %720 = vmatpush1.bf16.xpose.msra.mxu0 0
    %721 = vmatprep.subr.bf16.mxu0 0
    %722 = vmatpush1.bf16.xpose.msra.mxu0 0
    %723 = vmatprep.mubr.bf16.mxu0 0
    %724 = vmatmul.mubr.bf16.gmra.mrb[0].mxu0 %v686
    %v725 = vpop.f32.mrb[0].mxu0
    %v726 = vadd.f32 0.0, %v725
    %v727 = vpop.f32.mrb[0].mxu0
    %v728 = vpop.f32.mrb[0].mxu0
    %v729 = vpop.f32.mrb[0].mxu0
    %730 = vdwg.mxu0
    %v731 = vmul.f32 %v404, 0.35355338
    %v732 = vmul.f32 %v450, 0.35355338
    %v733 = vmul.f32 %v496, 0.35355338
    %v734 = vmul.f32 %v542, 0.35355338
    %v735 = vmul.f32 %v588, 0.35355338
    %v736 = vmul.f32 %v634, 0.35355338
    %v737 = vmul.f32 %v680, 0.35355338
    %v738 = vmul.f32 %v726, 0.35355338
    %v739 = vsel %vm362, %v731, -inf
    %740 = vmax.xlane.f32.xlu0 %v739
    %v741 = vpop.xlane.xlu0 %740
    %v742 = vsel %vm362, %v732, -inf
    %743 = vmax.xlane.f32.xlu0 %v742
    %v744 = vpop.xlane.xlu0 %743
    %v745 = vsel %vm362, %v733, -inf
    %746 = vmax.xlane.f32.xlu0 %v745
    %v747 = vpop.xlane.xlu0 %746
    %v748 = vsel %vm362, %v734, -inf
    %749 = vmax.xlane.f32.xlu0 %v748
    %v750 = vpop.xlane.xlu0 %749
    %v751 = vsel %vm362, %v735, -inf
    %752 = vmax.xlane.f32.xlu0 %v751
    %v753 = vpop.xlane.xlu0 %752
    %v754 = vsel %vm362, %v736, -inf
    %755 = vmax.xlane.f32.xlu0 %v754
    %v756 = vpop.xlane.xlu0 %755
    %v757 = vsel %vm362, %v737, -inf
    %758 = vmax.xlane.f32.xlu0 %v757
    %v759 = vpop.xlane.xlu0 %758
    %v760 = vsel %vm362, %v738, -inf
    %761 = vmax.xlane.f32.xlu0 %v760
    %v762 = vpop.xlane.xlu0 %761
    %v763 = vsub.f32 %v731, %v741
    %v764 = vsub.f32 %v732, %v744
    %v765 = vsub.f32 %v733, %v747
    %v766 = vsub.f32 %v734, %v750
    %v767 = vsub.f32 %v735, %v753
    %v768 = vsub.f32 %v736, %v756
    %v769 = vsub.f32 %v737, %v759
    %v770 = vsub.f32 %v738, %v762
    %v771 = vmul.f32 %v763, 1.442695
    %v772 = vpow.pop %v771
    %v773 = vmul.f32 %v764, 1.442695
    %v774 = vpow.pop %v773
    %v775 = vmul.f32 %v765, 1.442695
    %v776 = vpow.pop %v775
    %v777 = vmul.f32 %v766, 1.442695
    %v778 = vpow.pop %v777
    %v779 = vmul.f32 %v767, 1.442695
    %v780 = vpow.pop %v779
    %v781 = vmul.f32 %v768, 1.442695
    %v782 = vpow.pop %v781
    %v783 = vmul.f32 %v769, 1.442695
    %v784 = vpow.pop %v783
    %v785 = vmul.f32 %v770, 1.442695
    %v786 = vpow.pop %v785
    %v787 = vsel %vm362, %v772, 0.0
    %788 = vadd.xlane.f32.xlu0 %v787
    %v789 = vpop.xlane.xlu0 %788
    %v790 = vsel %vm362, %v774, 0.0
    %791 = vadd.xlane.f32.xlu0 %v790
    %v792 = vpop.xlane.xlu0 %791
    %v793 = vsel %vm362, %v776, 0.0
    %794 = vadd.xlane.f32.xlu0 %v793
    %v795 = vpop.xlane.xlu0 %794
    %v796 = vsel %vm362, %v778, 0.0
    %797 = vadd.xlane.f32.xlu0 %v796
    %v798 = vpop.xlane.xlu0 %797
    %v799 = vsel %vm362, %v780, 0.0
    %800 = vadd.xlane.f32.xlu0 %v799
    %v801 = vpop.xlane.xlu0 %800
    %v802 = vsel %vm362, %v782, 0.0
    %803 = vadd.xlane.f32.xlu0 %v802
    %v804 = vpop.xlane.xlu0 %803
    %v805 = vsel %vm362, %v784, 0.0
    %806 = vadd.xlane.f32.xlu0 %v805
    %v807 = vpop.xlane.xlu0 %806
    %v808 = vsel %vm362, %v786, 0.0
    %809 = vadd.xlane.f32.xlu0 %v808
    %v810 = vpop.xlane.xlu0 %809
    %v811 = vrcp.pop %v789
    %v812 = vrcp.pop %v792
    %v813 = vrcp.pop %v795
    %v814 = vrcp.pop %v798
    %v815 = vrcp.pop %v801
    %v816 = vrcp.pop %v804
    %v817 = vrcp.pop %v807
    %v818 = vrcp.pop %v810
    %v819 = vmul.f32 %v772, %v811
    %v820 = vmul.f32 %v774, %v812
    %v821 = vmul.f32 %v776, %v813
    %v822 = vmul.f32 %v778, %v814
    %v823 = vmul.f32 %v780, %v815
    %v824 = vmul.f32 %v782, %v816
    %v825 = vmul.f32 %v784, %v817
    %v826 = vmul.f32 %v786, %v818
    %v827 = vpack.c.bf16 %v819, %v819
    %v828 = vpack.c.bf16 %v820, %v820
    %v829 = vpack.c.bf16 %v821, %v821
    %v830 = vpack.c.bf16 %v822, %v822
    %v831 = vpack.c.bf16 %v823, %v823
    %v832 = vpack.c.bf16 %v824, %v824
    %v833 = vpack.c.bf16 %v825, %v825
    %v834 = vpack.c.bf16 %v826, %v826
    %v836 = vsel %vm362, %v827, 0
    %vm838 = vcmask 1043456
    %v840 = vsel %vm838, %v324, 0
    %842 = vmatprep.subr.bf16.mxu0 0
    %843 = vmatpush1.bf16.msra.mxu0 %v840
    %844 = vmatprep.subr.bf16.mxu0 0
    %845 = vmatpush1.bf16.msra.mxu0 0
    %846 = vmatprep.subr.bf16.mxu0 0
    %847 = vmatpush1.bf16.msra.mxu0 0
    %848 = vmatprep.subr.bf16.mxu0 0
    %849 = vmatpush1.bf16.msra.mxu0 0
    %850 = vmatprep.subr.bf16.mxu0 0
    %851 = vmatpush1.bf16.msra.mxu0 0
    %852 = vmatprep.subr.bf16.mxu0 0
    %853 = vmatpush1.bf16.msra.mxu0 0
    %854 = vmatprep.subr.bf16.mxu0 0
    %855 = vmatpush1.bf16.msra.mxu0 0
    %856 = vmatprep.subr.bf16.mxu0 0
    %857 = vmatpush1.bf16.msra.mxu0 0
    %858 = vmatprep.subr.bf16.mxu0 0
    %859 = vmatpush1.bf16.msra.mxu0 0
    %860 = vmatprep.subr.bf16.mxu0 0
    %861 = vmatpush1.bf16.msra.mxu0 0
    %862 = vmatprep.subr.bf16.mxu0 0
    %863 = vmatpush1.bf16.msra.mxu0 0
    %864 = vmatprep.subr.bf16.mxu0 0
    %865 = vmatpush1.bf16.msra.mxu0 0
    %866 = vmatprep.subr.bf16.mxu0 0
    %867 = vmatpush1.bf16.msra.mxu0 0
    %868 = vmatprep.subr.bf16.mxu0 0
    %869 = vmatpush1.bf16.msra.mxu0 0
    %870 = vmatprep.subr.bf16.mxu0 0
    %871 = vmatpush1.bf16.msra.mxu0 0
    %872 = vmatprep.subr.bf16.mxu0 0
    %873 = vmatpush1.bf16.msra.mxu0 0
    %874 = vmatprep.mubr.bf16.mxu0 0
    %875 = vmatmul.mubr.bf16.gmra.mrb[0].mxu0 %v836
    %v876 = vpop.f32.mrb[0].mxu0
    %v877 = vadd.f32 0.0, %v876
    %v878 = vpop.f32.mrb[0].mxu0
    %v879 = vpop.f32.mrb[0].mxu0
    %v880 = vpop.f32.mrb[0].mxu0
    %881 = vdwg.mxu0
    %v883 = vsel %vm362, %v828, 0
    %v886 = vsel %vm838, %v325, 0
    %888 = vmatprep.subr.bf16.mxu0 0
    %889 = vmatpush1.bf16.msra.mxu0 %v886
    %890 = vmatprep.subr.bf16.mxu0 0
    %891 = vmatpush1.bf16.msra.mxu0 0
    %892 = vmatprep.subr.bf16.mxu0 0
    %893 = vmatpush1.bf16.msra.mxu0 0
    %894 = vmatprep.subr.bf16.mxu0 0
    %895 = vmatpush1.bf16.msra.mxu0 0
    %896 = vmatprep.subr.bf16.mxu0 0
    %897 = vmatpush1.bf16.msra.mxu0 0
    %898 = vmatprep.subr.bf16.mxu0 0
    %899 = vmatpush1.bf16.msra.mxu0 0
    %900 = vmatprep.subr.bf16.mxu0 0
    %901 = vmatpush1.bf16.msra.mxu0 0
    %902 = vmatprep.subr.bf16.mxu0 0
    %903 = vmatpush1.bf16.msra.mxu0 0
    %904 = vmatprep.subr.bf16.mxu0 0
    %905 = vmatpush1.bf16.msra.mxu0 0
    %906 = vmatprep.subr.bf16.mxu0 0
    %907 = vmatpush1.bf16.msra.mxu0 0
    %908 = vmatprep.subr.bf16.mxu0 0
    %909 = vmatpush1.bf16.msra.mxu0 0
    %910 = vmatprep.subr.bf16.mxu0 0
    %911 = vmatpush1.bf16.msra.mxu0 0
    %912 = vmatprep.subr.bf16.mxu0 0
    %913 = vmatpush1.bf16.msra.mxu0 0
    %914 = vmatprep.subr.bf16.mxu0 0
    %915 = vmatpush1.bf16.msra.mxu0 0
    %916 = vmatprep.subr.bf16.mxu0 0
    %917 = vmatpush1.bf16.msra.mxu0 0
    %918 = vmatprep.subr.bf16.mxu0 0
    %919 = vmatpush1.bf16.msra.mxu0 0
    %920 = vmatprep.mubr.bf16.mxu0 0
    %921 = vmatmul.mubr.bf16.gmra.mrb[0].mxu0 %v883
    %v922 = vpop.f32.mrb[0].mxu0
    %v923 = vadd.f32 0.0, %v922
    %v924 = vpop.f32.mrb[0].mxu0
    %v925 = vpop.f32.mrb[0].mxu0
    %v926 = vpop.f32.mrb[0].mxu0
    %927 = vdwg.mxu0
    %v929 = vsel %vm362, %v829, 0
    %v932 = vsel %vm838, %v351, 0
    %934 = vmatprep.subr.bf16.mxu0 0
    %935 = vmatpush1.bf16.msra.mxu0 %v932
    %936 = vmatprep.subr.bf16.mxu0 0
    %937 = vmatpush1.bf16.msra.mxu0 0
    %938 = vmatprep.subr.bf16.mxu0 0
    %939 = vmatpush1.bf16.msra.mxu0 0
    %940 = vmatprep.subr.bf16.mxu0 0
    %941 = vmatpush1.bf16.msra.mxu0 0
    %942 = vmatprep.subr.bf16.mxu0 0
    %943 = vmatpush1.bf16.msra.mxu0 0
    %944 = vmatprep.subr.bf16.mxu0 0
    %945 = vmatpush1.bf16.msra.mxu0 0
    %946 = vmatprep.subr.bf16.mxu0 0
    %947 = vmatpush1.bf16.msra.mxu0 0
    %948 = vmatprep.subr.bf16.mxu0 0
    %949 = vmatpush1.bf16.msra.mxu0 0
    %950 = vmatprep.subr.bf16.mxu0 0
    %951 = vmatpush1.bf16.msra.mxu0 0
    %952 = vmatprep.subr.bf16.mxu0 0
    %953 = vmatpush1.bf16.msra.mxu0 0
    %954 = vmatprep.subr.bf16.mxu0 0
    %955 = vmatpush1.bf16.msra.mxu0 0
    %956 = vmatprep.subr.bf16.mxu0 0
    %957 = vmatpush1.bf16.msra.mxu0 0
    %958 = vmatprep.subr.bf16.mxu0 0
    %959 = vmatpush1.bf16.msra.mxu0 0
    %960 = vmatprep.subr.bf16.mxu0 0
    %961 = vmatpush1.bf16.msra.mxu0 0
    %962 = vmatprep.subr.bf16.mxu0 0
    %963 = vmatpush1.bf16.msra.mxu0 0
    %964 = vmatprep.subr.bf16.mxu0 0
    %965 = vmatpush1.bf16.msra.mxu0 0
    %966 = vmatprep.mubr.bf16.mxu0 0
    %967 = vmatmul.mubr.bf16.gmra.mrb[0].mxu0 %v929
    %v968 = vpop.f32.mrb[0].mxu0
    %v969 = vadd.f32 0.0, %v968
    %v970 = vpop.f32.mrb[0].mxu0
    %v971 = vpop.f32.mrb[0].mxu0
    %v972 = vpop.f32.mrb[0].mxu0
    %973 = vdwg.mxu0
    %v975 = vsel %vm362, %v830, 0
    %v978 = vsel %vm838, %v353, 0
    %980 = vmatprep.subr.bf16.mxu0 0
    %981 = vmatpush1.bf16.msra.mxu0 %v978
    %982 = vmatprep.subr.bf16.mxu0 0
    %983 = vmatpush1.bf16.msra.mxu0 0
    %984 = vmatprep.subr.bf16.mxu0 0
    %985 = vmatpush1.bf16.msra.mxu0 0
    %986 = vmatprep.subr.bf16.mxu0 0
    %987 = vmatpush1.bf16.msra.mxu0 0
    %988 = vmatprep.subr.bf16.mxu0 0
    %989 = vmatpush1.bf16.msra.mxu0 0
    %990 = vmatprep.subr.bf16.mxu0 0
    %991 = vmatpush1.bf16.msra.mxu0 0
    %992 = vmatprep.subr.bf16.mxu0 0
    %993 = vmatpush1.bf16.msra.mxu0 0
    %994 = vmatprep.subr.bf16.mxu0 0
    %995 = vmatpush1.bf16.msra.mxu0 0
    %996 = vmatprep.subr.bf16.mxu0 0
    %997 = vmatpush1.bf16.msra.mxu0 0
    %998 = vmatprep.subr.bf16.mxu0 0
    %999 = vmatpush1.bf16.msra.mxu0 0
    %1000 = vmatprep.subr.bf16.mxu0 0
    %1001 = vmatpush1.bf16.msra.mxu0 0
    %1002 = vmatprep.subr.bf16.mxu0 0
    %1003 = vmatpush1.bf16.msra.mxu0 0
    %1004 = vmatprep.subr.bf16.mxu0 0
    %1005 = vmatpush1.bf16.msra.mxu0 0
    %1006 = vmatprep.subr.bf16.mxu0 0
    %1007 = vmatpush1.bf16.msra.mxu0 0
    %1008 = vmatprep.subr.bf16.mxu0 0
    %1009 = vmatpush1.bf16.msra.mxu0 0
    %1010 = vmatprep.subr.bf16.mxu0 0
    %1011 = vmatpush1.bf16.msra.mxu0 0
    %1012 = vmatprep.mubr.bf16.mxu0 0
    %1013 = vmatmul.mubr.bf16.gmra.mrb[0].mxu0 %v975
    %v1014 = vpop.f32.mrb[0].mxu0
    %v1015 = vadd.f32 0.0, %v1014
    %v1016 = vpop.f32.mrb[0].mxu0
    %v1017 = vpop.f32.mrb[0].mxu0
    %v1018 = vpop.f32.mrb[0].mxu0
    %1019 = vdwg.mxu0
    %v1021 = vsel %vm362, %v831, 0
    %v1024 = vsel %vm838, %v355, 0
    %1026 = vmatprep.subr.bf16.mxu0 0
    %1027 = vmatpush1.bf16.msra.mxu0 %v1024
    %1028 = vmatprep.subr.bf16.mxu0 0
    %1029 = vmatpush1.bf16.msra.mxu0 0
    %1030 = vmatprep.subr.bf16.mxu0 0
    %1031 = vmatpush1.bf16.msra.mxu0 0
    %1032 = vmatprep.subr.bf16.mxu0 0
    %1033 = vmatpush1.bf16.msra.mxu0 0
    %1034 = vmatprep.subr.bf16.mxu0 0
    %1035 = vmatpush1.bf16.msra.mxu0 0
    %1036 = vmatprep.subr.bf16.mxu0 0
    %1037 = vmatpush1.bf16.msra.mxu0 0
    %1038 = vmatprep.subr.bf16.mxu0 0
    %1039 = vmatpush1.bf16.msra.mxu0 0
    %1040 = vmatprep.subr.bf16.mxu0 0
    %1041 = vmatpush1.bf16.msra.mxu0 0
    %1042 = vmatprep.subr.bf16.mxu0 0
    %1043 = vmatpush1.bf16.msra.mxu0 0
    %1044 = vmatprep.subr.bf16.mxu0 0
    %1045 = vmatpush1.bf16.msra.mxu0 0
    %1046 = vmatprep.subr.bf16.mxu0 0
    %1047 = vmatpush1.bf16.msra.mxu0 0
    %1048 = vmatprep.subr.bf16.mxu0 0
    %1049 = vmatpush1.bf16.msra.mxu0 0
    %1050 = vmatprep.subr.bf16.mxu0 0
    %1051 = vmatpush1.bf16.msra.mxu0 0
    %1052 = vmatprep.subr.bf16.mxu0 0
    %1053 = vmatpush1.bf16.msra.mxu0 0
    %1054 = vmatprep.subr.bf16.mxu0 0
    %1055 = vmatpush1.bf16.msra.mxu0 0
    %1056 = vmatprep.subr.bf16.mxu0 0
    %1057 = vmatpush1.bf16.msra.mxu0 0
    %1058 = vmatprep.mubr.bf16.mxu0 0
    %1059 = vmatmul.mubr.bf16.gmra.mrb[0].mxu0 %v1021
    %v1060 = vpop.f32.mrb[0].mxu0
    %v1061 = vadd.f32 0.0, %v1060
    %v1062 = vpop.f32.mrb[0].mxu0
    %v1063 = vpop.f32.mrb[0].mxu0
    %v1064 = vpop.f32.mrb[0].mxu0
    %1065 = vdwg.mxu0
    %v1067 = vsel %vm362, %v832, 0
    %v1070 = vsel %vm838, %v357, 0
    %1072 = vmatprep.subr.bf16.mxu0 0
    %1073 = vmatpush1.bf16.msra.mxu0 %v1070
    %1074 = vmatprep.subr.bf16.mxu0 0
    %1075 = vmatpush1.bf16.msra.mxu0 0
    %1076 = vmatprep.subr.bf16.mxu0 0
    %1077 = vmatpush1.bf16.msra.mxu0 0
    %1078 = vmatprep.subr.bf16.mxu0 0
    %1079 = vmatpush1.bf16.msra.mxu0 0
    %1080 = vmatprep.subr.bf16.mxu0 0
    %1081 = vmatpush1.bf16.msra.mxu0 0
    %1082 = vmatprep.subr.bf16.mxu0 0
    %1083 = vmatpush1.bf16.msra.mxu0 0
    %1084 = vmatprep.subr.bf16.mxu0 0
    %1085 = vmatpush1.bf16.msra.mxu0 0
    %1086 = vmatprep.subr.bf16.mxu0 0
    %1087 = vmatpush1.bf16.msra.mxu0 0
    %1088 = vmatprep.subr.bf16.mxu0 0
    %1089 = vmatpush1.bf16.msra.mxu0 0
    %1090 = vmatprep.subr.bf16.mxu0 0
    %1091 = vmatpush1.bf16.msra.mxu0 0
    %1092 = vmatprep.subr.bf16.mxu0 0
    %1093 = vmatpush1.bf16.msra.mxu0 0
    %1094 = vmatprep.subr.bf16.mxu0 0
    %1095 = vmatpush1.bf16.msra.mxu0 0
    %1096 = vmatprep.subr.bf16.mxu0 0
    %1097 = vmatpush1.bf16.msra.mxu0 0
    %1098 = vmatprep.subr.bf16.mxu0 0
    %1099 = vmatpush1.bf16.msra.mxu0 0
    %1100 = vmatprep.subr.bf16.mxu0 0
    %1101 = vmatpush1.bf16.msra.mxu0 0
    %1102 = vmatprep.subr.bf16.mxu0 0
    %1103 = vmatpush1.bf16.msra.mxu0 0
    %1104 = vmatprep.mubr.bf16.mxu0 0
    %1105 = vmatmul.mubr.bf16.gmra.mrb[0].mxu0 %v1067
    %v1106 = vpop.f32.mrb[0].mxu0
    %v1107 = vadd.f32 0.0, %v1106
    %v1108 = vpop.f32.mrb[0].mxu0
    %v1109 = vpop.f32.mrb[0].mxu0
    %v1110 = vpop.f32.mrb[0].mxu0
    %1111 = vdwg.mxu0
    %v1113 = vsel %vm362, %v833, 0
    %v1116 = vsel %vm838, %v359, 0
    %1118 = vmatprep.subr.bf16.mxu0 0
    %1119 = vmatpush1.bf16.msra.mxu0 %v1116
    %1120 = vmatprep.subr.bf16.mxu0 0
    %1121 = vmatpush1.bf16.msra.mxu0 0
    %1122 = vmatprep.subr.bf16.mxu0 0
    %1123 = vmatpush1.bf16.msra.mxu0 0
    %1124 = vmatprep.subr.bf16.mxu0 0
    %1125 = vmatpush1.bf16.msra.mxu0 0
    %1126 = vmatprep.subr.bf16.mxu0 0
    %1127 = vmatpush1.bf16.msra.mxu0 0
    %1128 = vmatprep.subr.bf16.mxu0 0
    %1129 = vmatpush1.bf16.msra.mxu0 0
    %1130 = vmatprep.subr.bf16.mxu0 0
    %1131 = vmatpush1.bf16.msra.mxu0 0
    %1132 = vmatprep.subr.bf16.mxu0 0
    %1133 = vmatpush1.bf16.msra.mxu0 0
    %1134 = vmatprep.subr.bf16.mxu0 0
    %1135 = vmatpush1.bf16.msra.mxu0 0
    %1136 = vmatprep.subr.bf16.mxu0 0
    %1137 = vmatpush1.bf16.msra.mxu0 0
    %1138 = vmatprep.subr.bf16.mxu0 0
    %1139 = vmatpush1.bf16.msra.mxu0 0
    %1140 = vmatprep.subr.bf16.mxu0 0
    %1141 = vmatpush1.bf16.msra.mxu0 0
    %1142 = vmatprep.subr.bf16.mxu0 0
    %1143 = vmatpush1.bf16.msra.mxu0 0
    %1144 = vmatprep.subr.bf16.mxu0 0
    %1145 = vmatpush1.bf16.msra.mxu0 0
    %1146 = vmatprep.subr.bf16.mxu0 0
    %1147 = vmatpush1.bf16.msra.mxu0 0
    %1148 = vmatprep.subr.bf16.mxu0 0
    %1149 = vmatpush1.bf16.msra.mxu0 0
    %1150 = vmatprep.mubr.bf16.mxu0 0
    %1151 = vmatmul.mubr.bf16.gmra.mrb[0].mxu0 %v1113
    %v1152 = vpop.f32.mrb[0].mxu0
    %v1153 = vadd.f32 0.0, %v1152
    %v1154 = vpop.f32.mrb[0].mxu0
    %v1155 = vpop.f32.mrb[0].mxu0
    %v1156 = vpop.f32.mrb[0].mxu0
    %1157 = vdwg.mxu0
    %v1159 = vsel %vm362, %v834, 0
    %v1162 = vsel %vm838, %v361, 0
    %1164 = vmatprep.subr.bf16.mxu0 0
    %1165 = vmatpush1.bf16.msra.mxu0 %v1162
    %1166 = vmatprep.subr.bf16.mxu0 0
    %1167 = vmatpush1.bf16.msra.mxu0 0
    %1168 = vmatprep.subr.bf16.mxu0 0
    %1169 = vmatpush1.bf16.msra.mxu0 0
    %1170 = vmatprep.subr.bf16.mxu0 0
    %1171 = vmatpush1.bf16.msra.mxu0 0
    %1172 = vmatprep.subr.bf16.mxu0 0
    %1173 = vmatpush1.bf16.msra.mxu0 0
    %1174 = vmatprep.subr.bf16.mxu0 0
    %1175 = vmatpush1.bf16.msra.mxu0 0
    %1176 = vmatprep.subr.bf16.mxu0 0
    %1177 = vmatpush1.bf16.msra.mxu0 0
    %1178 = vmatprep.subr.bf16.mxu0 0
    %1179 = vmatpush1.bf16.msra.mxu0 0
    %1180 = vmatprep.subr.bf16.mxu0 0
    %1181 = vmatpush1.bf16.msra.mxu0 0
    %1182 = vmatprep.subr.bf16.mxu0 0
    %1183 = vmatpush1.bf16.msra.mxu0 0
    %1184 = vmatprep.subr.bf16.mxu0 0
    %1185 = vmatpush1.bf16.msra.mxu0 0
    %1186 = vmatprep.subr.bf16.mxu0 0
    %1187 = vmatpush1.bf16.msra.mxu0 0
    %1188 = vmatprep.subr.bf16.mxu0 0
    %1189 = vmatpush1.bf16.msra.mxu0 0
    %1190 = vmatprep.subr.bf16.mxu0 0
    %1191 = vmatpush1.bf16.msra.mxu0 0
    %1192 = vmatprep.subr.bf16.mxu0 0
    %1193 = vmatpush1.bf16.msra.mxu0 0
    %1194 = vmatprep.subr.bf16.mxu0 0
    %1195 = vmatpush1.bf16.msra.mxu0 0
    %1196 = vmatprep.mubr.bf16.mxu0 0
    %1197 = vmatmul.mubr.bf16.gmra.mrb[0].mxu0 %v1159
    %v1198 = vpop.f32.mrb[0].mxu0
    %v1199 = vadd.f32 0.0, %v1198
    %v1200 = vpop.f32.mrb[0].mxu0
    %v1201 = vpop.f32.mrb[0].mxu0
    %v1202 = vpop.f32.mrb[0].mxu0
    %1203 = vdwg.mxu0
    %v1204 = vpack.c.bf16 %v877, %v877
    %v1205 = vpack.c.bf16 %v923, %v923
    %v1206 = vpack.c.bf16 %v969, %v969
    %v1207 = vpack.c.bf16 %v1015, %v1015
    %v1208 = vpack.c.bf16 %v1061, %v1061
    %v1209 = vpack.c.bf16 %v1107, %v1107
    %v1210 = vpack.c.bf16 %v1153, %v1153
    %v1211 = vpack.c.bf16 %v1199, %v1199
    %1214 = vrot.lane.b32.xlu0 %v1206, 8
    %v1215 = vpop.permute.xlu0 %1214
    %1216 = vrot.lane.b32.xlu0 %v1207, 8
    %v1217 = vpop.permute.xlu0 %1216
    %1220 = vrot.lane.b32.xlu0 %v1208, 16
    %v1221 = vpop.permute.xlu0 %1220
    %1222 = vrot.lane.b32.xlu0 %v1209, 16
    %v1223 = vpop.permute.xlu0 %1222
    %1226 = vrot.lane.b32.xlu0 %v1210, 24
    %v1227 = vpop.permute.xlu0 %1226
    %1228 = vrot.lane.b32.xlu0 %v1211, 24
    %v1229 = vpop.permute.xlu0 %1228
    %v1232 = vsel %vm362, %v1204, %v1215
    %v1235 = vsel %vm362, %v1205, %v1217
    %vm1236 = vcmask 130048
    %v1238 = vsel %vm1236, %v1232, %v1221
    %v1240 = vsel %vm1236, %v1235, %v1223
    %vm1241 = vcmask 195584
    %v1243 = vsel %vm1241, %v1238, %v1227
    %v1245 = vsel %vm1241, %v1240, %v1229
    %v1246 = vld [vmem:[#allocation5] sm:$0xf]
    %v1247 = vld [vmem:[#allocation5 + $0x4] sm:$0xf]
    %v1248 = vld [vmem:[#allocation5 + $0x8] sm:$0xf]
    %v1249 = vld [vmem:[#allocation5 + $0xc] sm:$0xf]
    %v1250 = vld [vmem:[#allocation8] sm:$0x1]
    %v1252 = vlaneseq
    %v1253 = vshrl.u32 %v1252, 7
    %v1254 = vsub.s32 0, %v1253
    %v1255 = vrot.slane %v1250, %v1254
    %v1259 = vunpack.c.l.b16 %v1243
    %v1260 = vunpack.c.l.b16 %v1245
    %v1261 = vpack.c.b16 %v1260, %v1259
    %v1266 = vunpack.c.l.b16 %v1246
    %v1267 = vunpack.c.l.b16 %v1247
    %v1268 = vunpack.c.l.b16 %v1248
    %v1269 = vunpack.c.l.b16 %v1249
    %v1270 = vpack.c.b16 %v1267, %v1266
    %v1271 = vpack.c.b16 %v1269, %v1268
    %v1275 = vsel %vm135, %v1261, 0
    %1277 = vmatprep.subr.bf16.mxu0 0
    %1278 = vmatpush1.bf16.msra.mxu0 %v1270
    %1279 = vmatprep.subr.bf16.mxu0 0
    %1280 = vmatpush1.bf16.msra.mxu0 %v1271
    %1281 = vmatprep.subr.bf16.mxu0 0
    %1282 = vmatpush1.bf16.msra.mxu0 0
    %1283 = vmatprep.subr.bf16.mxu0 0
    %1284 = vmatpush1.bf16.msra.mxu0 0
    %1285 = vmatprep.subr.bf16.mxu0 0
    %1286 = vmatpush1.bf16.msra.mxu0 0
    %1287 = vmatprep.subr.bf16.mxu0 0
    %1288 = vmatpush1.bf16.msra.mxu0 0
    %1289 = vmatprep.subr.bf16.mxu0 0
    %1290 = vmatpush1.bf16.msra.mxu0 0
    %1291 = vmatprep.subr.bf16.mxu0 0
    %1292 = vmatpush1.bf16.msra.mxu0 0
    %1293 = vmatprep.subr.bf16.mxu0 0
    %1294 = vmatpush1.bf16.msra.mxu0 0
    %1295 = vmatprep.subr.bf16.mxu0 0
    %1296 = vmatpush1.bf16.msra.mxu0 0
    %1297 = vmatprep.subr.bf16.mxu0 0
    %1298 = vmatpush1.bf16.msra.mxu0 0
    %1299 = vmatprep.subr.bf16.mxu0 0
    %1300 = vmatpush1.bf16.msra.mxu0 0
    %1301 = vmatprep.subr.bf16.mxu0 0
    %1302 = vmatpush1.bf16.msra.mxu0 0
    %1303 = vmatprep.subr.bf16.mxu0 0
    %1304 = vmatpush1.bf16.msra.mxu0 0
    %1305 = vmatprep.subr.bf16.mxu0 0
    %1306 = vmatpush1.bf16.msra.mxu0 0
    %1307 = vmatprep.subr.bf16.mxu0 0
    %1308 = vmatpush1.bf16.msra.mxu0 0
    %1309 = vmatprep.mubr.bf16.mxu0 0
    %1310 = vmatmul.mubr.bf16.gmra.mrb[0].mxu0 %v1275
    %v1311 = vpop.f32.mrb[0].mxu0
    %v1312 = vadd.f32 %v1255, %v1311
    %v1313 = vpop.f32.mrb[0].mxu0
    %v1314 = vpop.f32.mrb[0].mxu0
    %v1315 = vadd.f32 %v1255, %v1314
    %v1316 = vpop.f32.mrb[0].mxu0
    %1317 = vdwg.mxu0
    %v1318 = vadd.f32 %v109, %v1312
    %v1319 = vadd.f32 %v110, %v1315
    %v1320 = vld [vmem:[%s13] sm:$0x1]
    %v1321 = vld [vmem:[%s14] sm:$0x1]
    %v1322 = vsel %vm135, %v1318, 0.0
    %1323 = vadd.xlane.f32.xlu0 %v1322
    %v1324 = vpop.xlane.xlu0 %1323
    %v1325 = vsel %vm135, %v1319, 0.0
    %1326 = vadd.xlane.f32.xlu0 %v1325
    %v1327 = vpop.xlane.xlu0 %1326
    %v1328 = vrcp.pop 32.0
    %v1329 = vmul.f32 %v1324, %v1328
    %v1330 = vmul.f32 %v1327, %v1328
    %v1331 = vsub.f32 %v1318, %v1329
    %v1332 = vsub.f32 %v1319, %v1330
    %v1333 = vmul.f32 %v1331, %v1331
    %v1334 = vmul.f32 %v1332, %v1332
    %v1335 = vsel %vm135, %v1333, 0.0
    %1336 = vadd.xlane.f32.xlu0 %v1335
    %v1337 = vpop.xlane.xlu0 %1336
    %v1338 = vsel %vm135, %v1334, 0.0
    %1339 = vadd.xlane.f32.xlu0 %v1338
    %v1340 = vpop.xlane.xlu0 %1339
    %v1341 = vmul.f32 %v1337, %v1328
    %v1342 = vmul.f32 %v1340, %v1328
    %v1343 = vadd.f32 %v1341, 1e-05
    %v1344 = vadd.f32 %v1342, 1e-05
    %v1345 = vrsqrt.pop %v1343
    %v1346 = vrsqrt.pop %v1344
    %v1347 = vmul.f32 %v1331, %v1345
    %v1348 = vmul.f32 %v1332, %v1346
    %v1350 = vlaneseq
    %v1351 = vshrl.u32 %v1350, 7
    %v1352 = vsub.s32 0, %v1351
    %v1353 = vrot.slane %v1320, %v1352
    %v1355 = vmul.f32 %v1347, %v1353
    %v1356 = vmul.f32 %v1348, %v1353
    %v1358 = vlaneseq
    %v1359 = vshrl.u32 %v1358, 7
    %v1360 = vsub.s32 0, %v1359
    %v1361 = vrot.slane %v1321, %v1360
    %v1363 = vadd.f32 %v1355, %v1361
    %v1364 = vadd.f32 %v1356, %v1361
    %v1365 = vpack.c.bf16 %v1364, %v1363
    %v1366 = vld [vmem:[%s9] sm:$0xf]
    %v1367 = vld [vmem:[%s9 + $0x4] sm:$0xf]
    %v1368 = vld [vmem:[%s9 + $0x8] sm:$0xf]
    %v1369 = vld [vmem:[%s9 + $0xc] sm:$0xf]
    %v1370 = vld [vmem:[%s10] sm:$0x1]
    %v1372 = vlaneseq
    %v1373 = vshrl.u32 %v1372, 7
    %v1374 = vsub.s32 0, %v1373
    %v1375 = vrot.slane %v1370, %v1374
    %v1381 = vunpack.c.l.b16 %v1366
    %v1382 = vunpack.c.l.b16 %v1367
    %v1383 = vunpack.c.l.b16 %v1368
    %v1384 = vunpack.c.l.b16 %v1369
    %v1385 = vpack.c.b16 %v1382, %v1381
    %v1386 = vpack.c.b16 %v1384, %v1383
    %v1390 = vsel %vm135, %v1365, 0
    %1392 = vmatprep.subr.bf16.mxu0 0
    %1393 = vmatpush1.bf16.msra.mxu0 %v1385
    %1394 = vmatprep.subr.bf16.mxu0 0
    %1395 = vmatpush1.bf16.msra.mxu0 %v1386
    %1396 = vmatprep.subr.bf16.mxu0 0
    %1397 = vmatpush1.bf16.msra.mxu0 0
    %1398 = vmatprep.subr.bf16.mxu0 0
    %1399 = vmatpush1.bf16.msra.mxu0 0
    %1400 = vmatprep.subr.bf16.mxu0 0
    %1401 = vmatpush1.bf16.msra.mxu0 0
    %1402 = vmatprep.subr.bf16.mxu0 0
    %1403 = vmatpush1.bf16.msra.mxu0 0
    %1404 = vmatprep.subr.bf16.mxu0 0
    %1405 = vmatpush1.bf16.msra.mxu0 0
    %1406 = vmatprep.subr.bf16.mxu0 0
    %1407 = vmatpush1.bf16.msra.mxu0 0
    %1408 = vmatprep.subr.bf16.mxu0 0
    %1409 = vmatpush1.bf16.msra.mxu0 0
    %1410 = vmatprep.subr.bf16.mxu0 0
    %1411 = vmatpush1.bf16.msra.mxu0 0
    %1412 = vmatprep.subr.bf16.mxu0 0
    %1413 = vmatpush1.bf16.msra.mxu0 0
    %1414 = vmatprep.subr.bf16.mxu0 0
    %1415 = vmatpush1.bf16.msra.mxu0 0
    %1416 = vmatprep.subr.bf16.mxu0 0
    %1417 = vmatpush1.bf16.msra.mxu0 0
    %1418 = vmatprep.subr.bf16.mxu0 0
    %1419 = vmatpush1.bf16.msra.mxu0 0
    %1420 = vmatprep.subr.bf16.mxu0 0
    %1421 = vmatpush1.bf16.msra.mxu0 0
    %1422 = vmatprep.subr.bf16.mxu0 0
    %1423 = vmatpush1.bf16.msra.mxu0 0
    %1424 = vmatprep.mubr.bf16.mxu0 0
    %1425 = vmatmul.mubr.bf16.gmra.mrb[0].mxu0 %v1390
    %v1426 = vpop.f32.mrb[0].mxu0
    %v1427 = vadd.f32 %v1375, %v1426
    %v1428 = vpop.f32.mrb[0].mxu0
    %v1429 = vpop.f32.mrb[0].mxu0
    %v1430 = vadd.f32 %v1375, %v1429
    %v1431 = vpop.f32.mrb[0].mxu0
    %1432 = vdwg.mxu0
    %v1433 = vmax.f32 %v1427, 0.0
    %v1434 = vmax.f32 %v1430, 0.0
    %v1435 = vpack.c.bf16 %v1434, %v1433
    %v1436 = vld [vmem:[%s11] sm:$0xf]
    %v1437 = vld [vmem:[%s11 + $0x4] sm:$0xf]
    %v1438 = vld [vmem:[%s11 + $0x8] sm:$0xf]
    %v1439 = vld [vmem:[%s11 + $0xc] sm:$0xf]
    %v1440 = vld [vmem:[%s11 + $0x10] sm:$0xf]
    %v1441 = vld [vmem:[%s11 + $0x14] sm:$0xf]
    %v1442 = vld [vmem:[%s11 + $0x18] sm:$0xf]
    %v1443 = vld [vmem:[%s11 + $0x1c] sm:$0xf]
    %v1444 = vld [vmem:[%s12] sm:$0x1]
    %v1446 = vlaneseq
    %v1447 = vshrl.u32 %v1446, 7
    %v1448 = vsub.s32 0, %v1447
    %v1449 = vrot.slane %v1444, %v1448
    %v1459 = vunpack.c.l.b16 %v1436
    %v1460 = vunpack.c.l.b16 %v1437
    %v1461 = vunpack.c.l.b16 %v1438
    %v1462 = vunpack.c.l.b16 %v1439
    %v1463 = vunpack.c.l.b16 %v1440
    %v1464 = vunpack.c.l.b16 %v1441
    %v1465 = vunpack.c.l.b16 %v1442
    %v1466 = vunpack.c.l.b16 %v1443
    %v1467 = vpack.c.b16 %v1460, %v1459
    %v1468 = vpack.c.b16 %v1462, %v1461
    %v1469 = vpack.c.b16 %v1464, %v1463
    %v1470 = vpack.c.b16 %v1466, %v1465
    %vm1475 = vcmask 523264
    %v1477 = vsel %vm1475, %v1435, 0
    %1479 = vmatprep.subr.bf16.mxu0 0
    %1480 = vmatpush1.bf16.msra.mxu0 %v1467
    %1481 = vmatprep.subr.bf16.mxu0 0
    %1482 = vmatpush1.bf16.msra.mxu0 %v1468
    %1483 = vmatprep.subr.bf16.mxu0 0
    %1484 = vmatpush1.bf16.msra.mxu0 %v1469
    %1485 = vmatprep.subr.bf16.mxu0 0
    %1486 = vmatpush1.bf16.msra.mxu0 %v1470
    %1487 = vmatprep.subr.bf16.mxu0 0
    %1488 = vmatpush1.bf16.msra.mxu0 0
    %1489 = vmatprep.subr.bf16.mxu0 0
    %1490 = vmatpush1.bf16.msra.mxu0 0
    %1491 = vmatprep.subr.bf16.mxu0 0
    %1492 = vmatpush1.bf16.msra.mxu0 0
    %1493 = vmatprep.subr.bf16.mxu0 0
    %1494 = vmatpush1.bf16.msra.mxu0 0
    %1495 = vmatprep.subr.bf16.mxu0 0
    %1496 = vmatpush1.bf16.msra.mxu0 0
    %1497 = vmatprep.subr.bf16.mxu0 0
    %1498 = vmatpush1.bf16.msra.mxu0 0
    %1499 = vmatprep.subr.bf16.mxu0 0
    %1500 = vmatpush1.bf16.msra.mxu0 0
    %1501 = vmatprep.subr.bf16.mxu0 0
    %1502 = vmatpush1.bf16.msra.mxu0 0
    %1503 = vmatprep.subr.bf16.mxu0 0
    %1504 = vmatpush1.bf16.msra.mxu0 0
    %1505 = vmatprep.subr.bf16.mxu0 0
    %1506 = vmatpush1.bf16.msra.mxu0 0
    %1507 = vmatprep.subr.bf16.mxu0 0
    %1508 = vmatpush1.bf16.msra.mxu0 0
    %1509 = vmatprep.subr.bf16.mxu0 0
    %1510 = vmatpush1.bf16.msra.mxu0 0
    %1511 = vmatprep.mubr.bf16.mxu0 0
    %1512 = vmatmul.mubr.bf16.gmra.mrb[0].mxu0 %v1477
    %v1513 = vpop.f32.mrb[0].mxu0
    %v1514 = vadd.f32 %v1449, %v1513
    %v1515 = vpop.f32.mrb[0].mxu0
    %v1516 = vpop.f32.mrb[0].mxu0
    %v1517 = vadd.f32 %v1449, %v1516
    %v1518 = vpop.f32.mrb[0].mxu0
    %1519 = vdwg.mxu0
    %v1520 = vadd.f32 %v1363, %v1514
    %v1521 = vadd.f32 %v1364, %v1517
    %v1522 = vld [vmem:[%s15] sm:$0x1]
    %v1523 = vld [vmem:[%s16] sm:$0x1]
    %v1524 = vsel %vm135, %v1520, 0.0
    %1525 = vadd.xlane.f32.xlu0 %v1524
    %v1526 = vpop.xlane.xlu0 %1525
    %v1527 = vsel %vm135, %v1521, 0.0
    %1528 = vadd.xlane.f32.xlu0 %v1527
    %v1529 = vpop.xlane.xlu0 %1528
    %v1530 = vmul.f32 %v1526, %v1328
    %v1531 = vmul.f32 %v1529, %v1328
    %v1532 = vsub.f32 %v1520, %v1530
    %v1533 = vsub.f32 %v1521, %v1531
    %v1534 = vmul.f32 %v1532, %v1532
    %v1535 = vmul.f32 %v1533, %v1533
    %v1536 = vsel %vm135, %v1534, 0.0
    %1537 = vadd.xlane.f32.xlu0 %v1536
    %v1538 = vpop.xlane.xlu0 %1537
    %v1539 = vsel %vm135, %v1535, 0.0
    %1540 = vadd.xlane.f32.xlu0 %v1539
    %v1541 = vpop.xlane.xlu0 %1540
    %v1542 = vmul.f32 %v1538, %v1328
    %v1543 = vmul.f32 %v1541, %v1328
    %v1544 = vadd.f32 %v1542, 1e-05
    %v1545 = vadd.f32 %v1543, 1e-05
    %v1546 = vrsqrt.pop %v1544
    %v1547 = vrsqrt.pop %v1545
    %v1548 = vmul.f32 %v1532, %v1546
    %v1549 = vmul.f32 %v1533, %v1547
    %v1551 = vlaneseq
    %v1552 = vshrl.u32 %v1551, 7
    %v1553 = vsub.s32 0, %v1552
    %v1554 = vrot.slane %v1522, %v1553
    %v1556 = vmul.f32 %v1548, %v1554
    %v1557 = vmul.f32 %v1549, %v1554
    %v1559 = vlaneseq
    %v1560 = vshrl.u32 %v1559, 7
    %v1561 = vsub.s32 0, %v1560
    %v1562 = vrot.slane %v1523, %v1561
    %v1564 = vadd.f32 %v1556, %v1562
    %v1565 = vadd.f32 %v1557, %v1562
    %1566 = vst.msk [vmem:[#allocation10] sm:$0xff] %vm135, %v1564
    %1567 = vst.msk [vmem:[#allocation10 + $0x8] sm:$0xff] %vm135, %v1565
    // Predicated region
    $region86: #{tpu_custom_call.1} parent=1 // pred_check
      _
    $region87: #{tpu_custom_call.1} parent=1 // pred_check_branch
      %1569 = sbr.rel (0) target = $region89
    $region88: #{tpu_custom_call.1} parent=1 // pred_region
      %s1571 = ssub.s32 256, 256
      %1572 = vsyncadd [#allocation4], %s1571
      %s1573 = sshll.u32 [#allocation10], 4
      %s1574 = int_to_ptr.vmem [resolvable:$true] %s1573
      %1579 = dma.vmem_to_hbm [thread:$0]  %s1574, 256, %s17, [#allocation4], 128, 128, 8
    $region89: #{tpu_custom_call.1} parent=1 // pred_fallthru
      _
    // Predicated region
    $region90: #{tpu_custom_call.1} parent=1 // pred_check
      _
    $region91: #{tpu_custom_call.1} parent=1 // pred_check_branch
      %1581 = sbr.rel (0) target = $region93
    $region92: #{tpu_custom_call.1} parent=1 // pred_region
      %1582 = dma.done [#allocation4], 256
    $region93: #{tpu_custom_call.1} parent=1 // pred_fallthru
      _
    %1583 = vsyncpa [#allocation3], 1
    %1584 = vsyncpa [#allocation6], 1
    %1585 = vsyncpa [#allocation9], 1
    %1586 = vsyncpa [#allocation4], 1

</llo_original>
